<compile_context>
chip_gen: v5e
topology: v5e:2x2
jax: 0.10.0
libtpu: 0.0.40
codegen_flags: <defaults>
</compile_context>

<pallas_src>
import functools

import numpy as np
import jax
import jax.numpy as jnp
from jax.experimental import pallas as pl
from jax.experimental.pallas import tpu as pltpu


# ----------------------------------------------------------------------------
# Config (small, deterministic, consistent with Decoder1Step.__init__)
# ----------------------------------------------------------------------------
CFG = dict(
    d_model=32,
    n_heads=4,
    ff_dim=64,
    n_layers=2,
    s_params=8,
    ctx_len=8,
    batch=2,
    seq_length=8,
    decoder_act="relu",              # config['model']['decoder']['act']
    activation_last_layer="sigmoid",
)

LANES = 128


# ----------------------------------------------------------------------------
# positionalencoding1d (sin/cos concat 1-D PE, shape (1, L, channels))
# ----------------------------------------------------------------------------
def positionalencoding1d(x, orig_channels):
    channels = int(np.ceil(orig_channels / 2) * 2)
    inv_freq = 1.0 / (10000.0 ** (np.arange(0, channels, 2, dtype=np.float64) / channels))
    pos = np.arange(x, dtype=np.float64)
    sin_inp = np.einsum("i,j->ij", pos, inv_freq)
    emb = np.concatenate([np.sin(sin_inp), np.cos(sin_inp)], axis=-1)
    return np.asarray(emb[None, :, :orig_channels], dtype=np.float32)


def _align8(n):
    return ((n + 7) // 8) * 8


# ----------------------------------------------------------------------------
# Slab layouts: every tensor lives at (row_start, n_rows, n_cols) inside a
# (rows, 128) slab.  Entries are 8-row aligned so all loads are tile-friendly.
# ----------------------------------------------------------------------------
def _build_layouts(cfg):
    d, ff, nl = cfg["d_model"], cfg["ff_dim"], cfg["n_layers"]
    H, B, L = cfg["n_heads"], cfg["batch"], cfg["seq_length"]
    Lk = cfg["ctx_len"] + 1
    assert 3 * d <= LANES and ff <= LANES
    assert H * B * L <= LANES and H * B * Lk <= LANES

    def make(entries):
        lay, r = {}, 0
        for name, rows, cols in entries:
            lay[name] = (r, rows, cols)
            r += _align8(rows)
        return lay, _align8(r)

    w_entries = []
    for l in range(nl):
        w_entries += [(f"in_self_{l}", d, 3 * d), (f"in_cross_{l}", d, 3 * d),
                      (f"out_self_{l}", d, d), (f"out_cross_{l}", d, d),
                      (f"lin1_{l}", d, ff), (f"lin2_{l}", ff, d)]
    w_entries += [("head", d, LANES)]                     # head padded to 128 out lanes
    wlay, w_rows = make(w_entries)

    v_entries = []
    for l in range(nl):
        v_entries += [(f"inb_self_{l}", 1, 3 * d), (f"inb_cross_{l}", 1, 3 * d),
                      (f"outb_self_{l}", 1, d), (f"outb_cross_{l}", 1, d),
                      (f"norms_{l}", 6, d),
                      (f"lin1b_{l}", 1, ff), (f"lin2b_{l}", 1, d)]
    v_entries += [("fnorm", 2, d), ("headb", 1, LANES),
                  ("qtok", B * L, d),
                  ("mask_self", H * B * L, H * B * L),
                  ("mask_cross", H * B * L, H * B * Lk)]
    vlay, v_rows = make(v_entries)
    return wlay, w_rows, vlay, v_rows


# ----------------------------------------------------------------------------
# Single fused Pallas kernel: whole decoder forward
# ----------------------------------------------------------------------------
def _decoder_fused_kernel(vslab_ref, wslab_ref, mem_ref, out_ref, *,
                          B, L, Lk, D, H, n_layers, ff_act, last_act, wlay, vlay):
    f32 = jnp.float32
    bf16 = jnp.bfloat16
    Dh = D // H
    BL = B * L

    def W(name):                       # bf16 matmul weight tile
        r0, nr, nc = wlay[name]
        return wslab_ref[r0:r0 + nr, :nc]

    def Vv(name):                      # f32 bias / norm / constant tile
        r0, nr, nc = vlay[name]
        return vslab_ref[r0:r0 + nr, :nc]

    def ln(v, g, b):
        # PyTorch LayerNorm: biased variance, eps = 1e-5 (all f32)
        mu = jnp.mean(v, axis=-1, keepdims=True)
        c = v - mu
        var = jnp.mean(c * c, axis=-1, keepdims=True)
        return c * jax.lax.rsqrt(var + 1e-5) * g + b

    def bdot(a, b):                    # a @ b, bf16 MXU operands, f32 accumulate
        return jax.lax.dot_general(a.astype(bf16), b.astype(bf16),
                                   (((1,), (0,)), ((), ())),
                                   preferred_element_type=f32)

    def bdot_t(a, b):                  # a @ b.T, bf16 MXU operands, f32 accumulate
        return jax.lax.dot_general(a.astype(bf16), b.astype(bf16),
                                   (((1,), (1,)), ((), ())),
                                   preferred_element_type=f32)

    def to_heads(t):                   # (N, D) -> (H*N, Dh), head-major row groups
        return jnp.concatenate([t[:, h * Dh:(h + 1) * Dh] for h in range(H)], axis=0)

    def from_heads(t, n):              # (H*n, Dh) -> (n, D), heads back into lanes
        return jnp.concatenate([t[h * n:(h + 1) * n, :] for h in range(H)], axis=1)

    def attention(q_g, k_g, v_g, mask, w_out_name, outb):
        # q_g: (H*BL, Dh); k_g/v_g: (H*B*Nk, Dh); mask is block-diagonal additive.
        s = bdot_t(q_g, k_g) + mask                              # (H*BL, H*B*Nk)
        m = jnp.max(s, axis=-1, keepdims=True)
        p = jnp.exp(s - m)
        p = p * pl.reciprocal(jnp.sum(p, axis=-1, keepdims=True), approx=True)
        o_g = bdot(p, v_g)                                       # (H*BL, Dh)
        o = from_heads(o_g, BL)                                  # (BL, D)
        return bdot(o, W(w_out_name)) + outb                     # (BL, D)

    mem = mem_ref[...]                                           # (B*Lk, D) f32, batch-major
    x = Vv("qtok")                                               # (BL, D) f32, batch-major
    mask_self = Vv("mask_self")                                  # (H*BL, H*B*L)
    mask_cross = Vv("mask_cross")                                # (H*BL, H*B*Lk)

    for l in range(n_layers):
        norms = Vv(f"norms_{l}")                                 # (6, D)

        # ---------------- self-attention (fused QKV, block-diag over B*H) ----------------
        qkv = bdot(x, W(f"in_self_{l}")) + Vv(f"inb_self_{l}")   # (BL, 3D); q-scale folded
        sa = attention(to_heads(qkv[:, :D]), to_heads(qkv[:, D:2 * D]),
                       to_heads(qkv[:, 2 * D:]), mask_self,
                       f"out_self_{l}", Vv(f"outb_self_{l}"))
        x = ln(x + sa, norms[0:1, :], norms[1:2, :])

        # -------------- cross-attention (q from tgt, one fused KV over all batches) --------------
        w_in_c = W(f"in_cross_{l}")
        b_in_c = Vv(f"inb_cross_{l}")
        q = bdot(x, w_in_c[:, :D]) + b_in_c[:, :D]               # (BL, D); q-scale folded
        kv = bdot(mem, w_in_c[:, D:]) + b_in_c[:, D:]            # (B*Lk, 2D)
        ca = attention(to_heads(q), to_heads(kv[:, :D]), to_heads(kv[:, D:]),
                       mask_cross, f"out_cross_{l}", Vv(f"outb_cross_{l}"))
        x = ln(x + ca, norms[2:3, :], norms[3:4, :])

        # ---------------------------- feed-forward ----------------------------
        h1 = bdot(x, W(f"lin1_{l}")) + Vv(f"lin1b_{l}")
        if ff_act == "relu":
            h1 = jnp.maximum(h1, 0.0)
        elif ff_act == "gelu":
            h1 = jax.nn.gelu(h1)
        h2 = bdot(h1, W(f"lin2_{l}")) + Vv(f"lin2b_{l}")
        x = ln(x + h2, norms[4:5, :], norms[5:6, :])

    # ------------------------- final norm + head (lane-dense output) -------------------------
    fn = Vv("fnorm")
    xn = ln(x, fn[0:1, :], fn[1:2, :])
    y = bdot(xn, W("head")) + Vv("headb")                        # (BL, 128)
    if last_act == "sigmoid":
        y = jax.nn.sigmoid(y)
    elif last_act == "relu":
        y = jnp.maximum(y, 0.0)
    out_ref[...] = y


# ----------------------------------------------------------------------------
# jitted forward wrapper (single pallas_call, 3 operands)
# ----------------------------------------------------------------------------
def make_decoder(cfg):
    d, H, nl, sp = cfg["d_model"], cfg["n_heads"], cfg["n_layers"], cfg["s_params"]
    wlay, _, vlay, _ = _build_layouts(cfg)

    def forward(packed, z, context, visual_features, seq_length):
        del visual_features  # unused by Decoder1Step.forward (same as reference)
        # ctx_z == 'cat':  context = cat((context, z[None]), dim=0)
        context = jnp.concatenate([context, z[None]], axis=0)            # (Lk, B, D)
        Lk, B, _ = context.shape
        L = int(seq_length)
        # query tokens / masks are baked into the packed slab for these static sizes
        assert (B, L, Lk) == (cfg["batch"], cfg["seq_length"], cfg["ctx_len"] + 1)

        mem = jnp.transpose(context, (1, 0, 2)).reshape(B * Lk, d)       # batch-major memory rows

        kernel = functools.partial(
            _decoder_fused_kernel, B=B, L=L, Lk=Lk, D=d, H=H, n_layers=nl,
            ff_act=cfg["decoder_act"], last_act=cfg["activation_last_layer"],
            wlay=wlay, vlay=vlay)

        y = pl.pallas_call(
            kernel,
            out_shape=jax.ShapeDtypeStruct((B * L, LANES), jnp.float32),
            compiler_params=pltpu.CompilerParams(vmem_limit_bytes=4 * 1024 * 1024),
        )(packed["vslab"], packed["wslab"], mem)

        # rows are (b, l) ordered; drop the lane padding of the head
        return y[:, :sp].reshape(B, L, sp)

    return jax.jit(forward, static_argnums=(4,))


# ----------------------------------------------------------------------------
# Deterministic parameter initialization (shapes from Decoder1Step.__init__)
# ----------------------------------------------------------------------------
def init_params(key, cfg):
    d, ff, nl, sp = cfg["d_model"], cfg["ff_dim"], cfg["n_layers"], cfg["s_params"]
    keys = iter(jax.random.split(key, 256))

    def nrm(shape, scale=0.05):
        return scale * jax.random.normal(next(keys), shape, dtype=jnp.float32)

    def mha_params():
        return dict(
            in_proj_weight=nrm((3 * d, d)),
            in_proj_bias=nrm((3 * d,)),
            out_proj_weight=nrm((d, d)),
            out_proj_bias=nrm((d,)),
        )

    layers = []
    for _ in range(nl):
        layers.append(dict(
            self_attn=mha_params(),
            cross_attn=mha_params(),
            norm1_w=jnp.ones((d,), jnp.float32), norm1_b=jnp.zeros((d,), jnp.float32),
            norm2_w=jnp.ones((d,), jnp.float32), norm2_b=jnp.zeros((d,), jnp.float32),
            norm3_w=jnp.ones((d,), jnp.float32), norm3_b=jnp.zeros((d,), jnp.float32),
            linear1_w=nrm((ff, d)), linear1_b=nrm((ff,)),
            linear2_w=nrm((d, ff)), linear2_b=nrm((d,)),
        ))

    # TODO(synk): PositionalEncoding submodule is constructed but unused in
    # Decoder1Step.forward, so it is not instantiated here.
    return dict(
        layers=layers,
        final_norm_w=jnp.ones((d,), jnp.float32),
        final_norm_b=jnp.zeros((d,), jnp.float32),
        head_w=nrm((sp, d)),
        head_b=nrm((sp,)),
    )


# ----------------------------------------------------------------------------
# One-time parameter packing into two slabs:
#   wslab (bf16): all matmul weights, pre-transposed, q-scale folded, head lane-padded.
#   vslab (f32):  biases, norms, PE query tokens, block-diagonal attention masks.
# ----------------------------------------------------------------------------
def pack_params(params, cfg):
    d, ff, nl, sp = cfg["d_model"], cfg["ff_dim"], cfg["n_layers"], cfg["s_params"]
    H, B, L = cfg["n_heads"], cfg["batch"], cfg["seq_length"]
    Lk = cfg["ctx_len"] + 1
    Dh = d // H
    scale = 1.0 / float(np.sqrt(Dh))

    wlay, w_rows, vlay, v_rows = _build_layouts(cfg)
    wslab = np.zeros((w_rows, LANES), np.float32)
    vslab = np.zeros((v_rows, LANES), np.float32)

    def put_w(name, arr):
        r0, nr, nc = wlay[name]
        wslab[r0:r0 + nr, :nc] = np.asarray(arr, np.float32)

    def put_v(name, arr):
        r0, nr, nc = vlay[name]
        vslab[r0:r0 + nr, :nc] = np.asarray(arr, np.float32)

    for l, lp in enumerate(params["layers"]):
        for tag, name in (("self", "self_attn"), ("cross", "cross_attn")):
            ap = lp[name]
            wT = np.array(np.asarray(ap["in_proj_weight"]).T)        # (d, 3d)
            bi = np.array(np.asarray(ap["in_proj_bias"]))            # (3d,)
            wT[:, :d] *= scale                                        # fold 1/sqrt(Dh) into Q proj
            bi[:d] *= scale
            put_w(f"in_{tag}_{l}", wT)
            put_v(f"inb_{tag}_{l}", bi.reshape(1, 3 * d))
            put_w(f"out_{tag}_{l}", np.asarray(ap["out_proj_weight"]).T)
            put_v(f"outb_{tag}_{l}", np.asarray(ap["out_proj_bias"]).reshape(1, d))
        put_v(f"norms_{l}", np.stack([np.asarray(lp["norm1_w"]), np.asarray(lp["norm1_b"]),
                                      np.asarray(lp["norm2_w"]), np.asarray(lp["norm2_b"]),
                                      np.asarray(lp["norm3_w"]), np.asarray(lp["norm3_b"])]))
        put_w(f"lin1_{l}", np.asarray(lp["linear1_w"]).T)
        put_v(f"lin1b_{l}", np.asarray(lp["linear1_b"]).reshape(1, ff))
        put_w(f"lin2_{l}", np.asarray(lp["linear2_w"]).T)
        put_v(f"lin2b_{l}", np.asarray(lp["linear2_b"]).reshape(1, d))

    headT = np.zeros((d, LANES), np.float32)
    headT[:, :sp] = np.asarray(params["head_w"]).T
    put_w("head", headT)
    headb = np.zeros((1, LANES), np.float32)
    headb[0, :sp] = np.asarray(params["head_b"])
    put_v("headb", headb)
    put_v("fnorm", np.stack([np.asarray(params["final_norm_w"]),
                             np.asarray(params["final_norm_b"])]))

    # query tokens: positionalencoding1d, repeated per batch (batch-major rows)
    pe = positionalencoding1d(L, d)[0]                                # (L, d)
    put_v("qtok", np.tile(pe, (B, 1)))                                # (B*L, d)

    # block-diagonal additive masks over (head, batch) groups (head-major rows)
    def bd_mask(nq, nk):
        rows, cols = H * B * nq, H * B * nk
        qg = np.arange(rows)[:, None] // nq
        kg = np.arange(cols)[None, :] // nk
        return np.where(qg == kg, 0.0, -1e30).astype(np.float32)
    put_v("mask_self", bd_mask(L, L))
    put_v("mask_cross", bd_mask(L, Lk))

    return dict(wslab=jnp.asarray(wslab, jnp.bfloat16),
                vslab=jnp.asarray(vslab, jnp.float32))


# ----------------------------------------------------------------------------
# Main
# ----------------------------------------------------------------------------
if __name__ == "__main__":
    cfg = CFG
    key = jax.random.PRNGKey(0)
    k_p, k_z, k_c, k_v = jax.random.split(key, 4)

    params = init_params(k_p, cfg)
    packed = pack_params(params, cfg)
    decoder_forward = make_decoder(cfg)

    z = jax.random.normal(k_z, (cfg["batch"], cfg["d_model"]), dtype=jnp.float32)
    context = jax.random.normal(k_c, (cfg["ctx_len"], cfg["batch"], cfg["d_model"]),
                                dtype=jnp.float32)
    visual_features = jax.random.normal(k_v, (cfg["batch"], 4, 16, 16), dtype=jnp.float32)

    out = decoder_forward(packed, z, context, visual_features, cfg["seq_length"])
    out = jax.block_until_ready(out)

    assert out.shape == (cfg["batch"], cfg["seq_length"], cfg["s_params"]), out.shape
    assert bool(jnp.all(jnp.isfinite(out)))
    print("KERNEL_OK")
</pallas_src>

<mosaic_0001>
module attributes {stable_mosaic.version = 11 : i64} {
  func.func @_decoder_fused_kernel(%arg0: memref<272x128xf32, #tpu.memory_space<vmem>>, %arg1: memref<480x128xbf16, #tpu.memory_space<vmem>>, %arg2: memref<18x32xf32, #tpu.memory_space<vmem>>, %arg3: memref<16x128xf32, #tpu.memory_space<vmem>>) attributes {dimension_semantics = [], scalar_prefetch = 0 : i64, scratch_operands = 0 : i64, tpu.core_type = #tpu.core_type<tc>} {
    %c0 = arith.constant 0 : index
    %c0_0 = arith.constant 0 : index
    %0 = vector.load %arg2[%c0, %c0_0] : memref<18x32xf32, #tpu.memory_space<vmem>>, vector<18x32xf32>
    %c128 = arith.constant 128 : index
    %c0_1 = arith.constant 0 : index
    %1 = vector.load %arg0[%c128, %c0_1] : memref<272x128xf32, #tpu.memory_space<vmem>>, vector<16x32xf32>
    %c144 = arith.constant 144 : index
    %c0_2 = arith.constant 0 : index
    %2 = vector.load %arg0[%c144, %c0_2] : memref<272x128xf32, #tpu.memory_space<vmem>>, vector<64x64xf32>
    %c208 = arith.constant 208 : index
    %c0_3 = arith.constant 0 : index
    %3 = vector.load %arg0[%c208, %c0_3] : memref<272x128xf32, #tpu.memory_space<vmem>>, vector<64x72xf32>
    %c32 = arith.constant 32 : index
    %c0_4 = arith.constant 0 : index
    %4 = vector.load %arg0[%c32, %c0_4] : memref<272x128xf32, #tpu.memory_space<vmem>>, vector<6x32xf32>
    %c0_5 = arith.constant 0 : index
    %c0_6 = arith.constant 0 : index
    %5 = vector.load %arg1[%c0_5, %c0_6] : memref<480x128xbf16, #tpu.memory_space<vmem>>, vector<32x96xbf16>
    %6 = arith.truncf %1 : vector<16x32xf32> to vector<16x32xbf16>
    %cst = arith.constant dense<0.000000e+00> : vector<16x96xf32>
    %7 = tpu.matmul %6, %5, %cst {dimension_numbers = #tpu.dot_dimension_numbers<[1], [0], [0], [1], [0, 0, 1, 1], [], []>} : vector<16x32xbf16>, vector<32x96xbf16>, vector<16x96xf32> -> vector<16x96xf32>
    %c0_7 = arith.constant 0 : index
    %c0_8 = arith.constant 0 : index
    %8 = vector.load %arg0[%c0_7, %c0_8] : memref<272x128xf32, #tpu.memory_space<vmem>>, vector<1x96xf32>
    %9 = vector.broadcast %8 : vector<1x96xf32> to vector<16x96xf32>
    %10 = arith.addf %7, %9 : vector<16x96xf32>
    %11 = vector.extract_strided_slice %10 {offsets = [0, 0], sizes = [16, 32], strides = [1, 1]} : vector<16x96xf32> to vector<16x32xf32>
    %12 = vector.extract_strided_slice %11 {offsets = [0, 0], sizes = [16, 8], strides = [1, 1]} : vector<16x32xf32> to vector<16x8xf32>
    %13 = vector.extract_strided_slice %11 {offsets = [0, 8], sizes = [16, 8], strides = [1, 1]} : vector<16x32xf32> to vector<16x8xf32>
    %14 = vector.extract_strided_slice %11 {offsets = [0, 16], sizes = [16, 8], strides = [1, 1]} : vector<16x32xf32> to vector<16x8xf32>
    %15 = vector.extract_strided_slice %11 {offsets = [0, 24], sizes = [16, 8], strides = [1, 1]} : vector<16x32xf32> to vector<16x8xf32>
    %16 = tpu.concatenate %12, %13, %14, %15 in 0 : vector<16x8xf32>, vector<16x8xf32>, vector<16x8xf32>, vector<16x8xf32> -> vector<64x8xf32>
    %17 = vector.extract_strided_slice %10 {offsets = [0, 32], sizes = [16, 32], strides = [1, 1]} : vector<16x96xf32> to vector<16x32xf32>
    %18 = vector.extract_strided_slice %17 {offsets = [0, 0], sizes = [16, 8], strides = [1, 1]} : vector<16x32xf32> to vector<16x8xf32>
    %19 = vector.extract_strided_slice %17 {offsets = [0, 8], sizes = [16, 8], strides = [1, 1]} : vector<16x32xf32> to vector<16x8xf32>
    %20 = vector.extract_strided_slice %17 {offsets = [0, 16], sizes = [16, 8], strides = [1, 1]} : vector<16x32xf32> to vector<16x8xf32>
    %21 = vector.extract_strided_slice %17 {offsets = [0, 24], sizes = [16, 8], strides = [1, 1]} : vector<16x32xf32> to vector<16x8xf32>
    %22 = tpu.concatenate %18, %19, %20, %21 in 0 : vector<16x8xf32>, vector<16x8xf32>, vector<16x8xf32>, vector<16x8xf32> -> vector<64x8xf32>
    %23 = vector.extract_strided_slice %10 {offsets = [0, 64], sizes = [16, 32], strides = [1, 1]} : vector<16x96xf32> to vector<16x32xf32>
    %24 = vector.extract_strided_slice %23 {offsets = [0, 0], sizes = [16, 8], strides = [1, 1]} : vector<16x32xf32> to vector<16x8xf32>
    %25 = vector.extract_strided_slice %23 {offsets = [0, 8], sizes = [16, 8], strides = [1, 1]} : vector<16x32xf32> to vector<16x8xf32>
    %26 = vector.extract_strided_slice %23 {offsets = [0, 16], sizes = [16, 8], strides = [1, 1]} : vector<16x32xf32> to vector<16x8xf32>
    %27 = vector.extract_strided_slice %23 {offsets = [0, 24], sizes = [16, 8], strides = [1, 1]} : vector<16x32xf32> to vector<16x8xf32>
    %28 = tpu.concatenate %24, %25, %26, %27 in 0 : vector<16x8xf32>, vector<16x8xf32>, vector<16x8xf32>, vector<16x8xf32> -> vector<64x8xf32>
    %c16 = arith.constant 16 : index
    %c0_9 = arith.constant 0 : index
    %29 = vector.load %arg0[%c16, %c0_9] : memref<272x128xf32, #tpu.memory_space<vmem>>, vector<1x32xf32>
    %30 = arith.truncf %16 : vector<64x8xf32> to vector<64x8xbf16>
    %31 = arith.truncf %22 : vector<64x8xf32> to vector<64x8xbf16>
    %cst_10 = arith.constant dense<0.000000e+00> : vector<64x64xf32>
    %32 = tpu.matmul %30, %31, %cst_10 {dimension_numbers = #tpu.dot_dimension_numbers<[1], [1], [0], [0], [0, 0, 1, 0], [], []>} : vector<64x8xbf16>, vector<64x8xbf16>, vector<64x64xf32> -> vector<64x64xf32>
    %33 = arith.addf %32, %2 : vector<64x64xf32>
    %cst_11 = arith.constant dense<0xFF800000> : vector<64xf32>
    %34 = vector.multi_reduction <maximumf>, %33, %cst_11 [1] : vector<64x64xf32> to vector<64xf32>
    %35 = vector.shape_cast %34 : vector<64xf32> to vector<64x1xf32>
    %36 = vector.broadcast %35 : vector<64x1xf32> to vector<64x64xf32>
    %37 = arith.subf %33, %36 : vector<64x64xf32>
    %38 = math.exp %37 : vector<64x64xf32>
    %cst_12 = arith.constant dense<0.000000e+00> : vector<64xf32>
    %39 = vector.multi_reduction <add>, %38, %cst_12 [1] : vector<64x64xf32> to vector<64xf32>
    %40 = vector.shape_cast %39 : vector<64xf32> to vector<64x1xf32>
    %41 = tpu.reciprocal %40 {approx = true} : vector<64x1xf32> -> vector<64x1xf32>
    %42 = vector.broadcast %41 : vector<64x1xf32> to vector<64x64xf32>
    %43 = arith.mulf %38, %42 : vector<64x64xf32>
    %44 = arith.truncf %43 : vector<64x64xf32> to vector<64x64xbf16>
    %45 = arith.truncf %28 : vector<64x8xf32> to vector<64x8xbf16>
    %cst_13 = arith.constant dense<0.000000e+00> : vector<64x8xf32>
    %46 = tpu.matmul %44, %45, %cst_13 {dimension_numbers = #tpu.dot_dimension_numbers<[1], [0], [0], [1], [0, 0, 1, 1], [], []>} : vector<64x64xbf16>, vector<64x8xbf16>, vector<64x8xf32> -> vector<64x8xf32>
    %47 = vector.extract_strided_slice %46 {offsets = [0, 0], sizes = [16, 8], strides = [1, 1]} : vector<64x8xf32> to vector<16x8xf32>
    %48 = vector.extract_strided_slice %46 {offsets = [16, 0], sizes = [16, 8], strides = [1, 1]} : vector<64x8xf32> to vector<16x8xf32>
    %49 = vector.extract_strided_slice %46 {offsets = [32, 0], sizes = [16, 8], strides = [1, 1]} : vector<64x8xf32> to vector<16x8xf32>
    %50 = vector.extract_strided_slice %46 {offsets = [48, 0], sizes = [16, 8], strides = [1, 1]} : vector<64x8xf32> to vector<16x8xf32>
    %51 = tpu.concatenate %47, %48, %49, %50 in 1 : vector<16x8xf32>, vector<16x8xf32>, vector<16x8xf32>, vector<16x8xf32> -> vector<16x32xf32>
    %c64 = arith.constant 64 : index
    %c0_14 = arith.constant 0 : index
    %52 = vector.load %arg1[%c64, %c0_14] : memref<480x128xbf16, #tpu.memory_space<vmem>>, vector<32x32xbf16>
    %53 = arith.truncf %51 : vector<16x32xf32> to vector<16x32xbf16>
    %cst_15 = arith.constant dense<0.000000e+00> : vector<16x32xf32>
    %54 = tpu.matmul %53, %52, %cst_15 {dimension_numbers = #tpu.dot_dimension_numbers<[1], [0], [0], [1], [0, 0, 1, 1], [], []>} : vector<16x32xbf16>, vector<32x32xbf16>, vector<16x32xf32> -> vector<16x32xf32>
    %55 = vector.broadcast %29 : vector<1x32xf32> to vector<16x32xf32>
    %56 = arith.addf %54, %55 : vector<16x32xf32>
    %57 = arith.addf %1, %56 : vector<16x32xf32>
    %58 = vector.extract_strided_slice %4 {offsets = [0, 0], sizes = [1, 32], strides = [1, 1]} : vector<6x32xf32> to vector<1x32xf32>
    %59 = vector.extract_strided_slice %4 {offsets = [1, 0], sizes = [1, 32], strides = [1, 1]} : vector<6x32xf32> to vector<1x32xf32>
    %cst_16 = arith.constant dense<0.000000e+00> : vector<16xf32>
    %60 = vector.multi_reduction <add>, %57, %cst_16 [1] : vector<16x32xf32> to vector<16xf32>
    %61 = vector.shape_cast %60 : vector<16xf32> to vector<16x1xf32>
    %cst_17 = arith.constant 3.200000e+01 : f32
    %62 = vector.broadcast %cst_17 : f32 to vector<16x1xf32>
    %63 = arith.divf %61, %62 : vector<16x1xf32>
    %64 = vector.broadcast %63 : vector<16x1xf32> to vector<16x32xf32>
    %65 = arith.subf %57, %64 : vector<16x32xf32>
    %66 = arith.mulf %65, %65 : vector<16x32xf32>
    %cst_18 = arith.constant dense<0.000000e+00> : vector<16xf32>
    %67 = vector.multi_reduction <add>, %66, %cst_18 [1] : vector<16x32xf32> to vector<16xf32>
    %68 = vector.shape_cast %67 : vector<16xf32> to vector<16x1xf32>
    %cst_19 = arith.constant 3.200000e+01 : f32
    %69 = vector.broadcast %cst_19 : f32 to vector<16x1xf32>
    %70 = arith.divf %68, %69 : vector<16x1xf32>
    %cst_20 = arith.constant 9.99999974E-6 : f32
    %71 = vector.broadcast %cst_20 : f32 to vector<16x1xf32>
    %72 = arith.addf %70, %71 : vector<16x1xf32>
    %73 = math.rsqrt %72 : vector<16x1xf32>
    %74 = vector.broadcast %73 : vector<16x1xf32> to vector<16x32xf32>
    %75 = arith.mulf %65, %74 : vector<16x32xf32>
    %76 = vector.broadcast %58 : vector<1x32xf32> to vector<16x32xf32>
    %77 = arith.mulf %75, %76 : vector<16x32xf32>
    %78 = vector.broadcast %59 : vector<1x32xf32> to vector<16x32xf32>
    %79 = arith.addf %77, %78 : vector<16x32xf32>
    %c32_21 = arith.constant 32 : index
    %c0_22 = arith.constant 0 : index
    %80 = vector.load %arg1[%c32_21, %c0_22] : memref<480x128xbf16, #tpu.memory_space<vmem>>, vector<32x96xbf16>
    %c8 = arith.constant 8 : index
    %c0_23 = arith.constant 0 : index
    %81 = vector.load %arg0[%c8, %c0_23] : memref<272x128xf32, #tpu.memory_space<vmem>>, vector<1x96xf32>
    %82 = vector.extract_strided_slice %80 {offsets = [0, 0], sizes = [32, 32], strides = [1, 1]} : vector<32x96xbf16> to vector<32x32xbf16>
    %83 = arith.truncf %79 : vector<16x32xf32> to vector<16x32xbf16>
    %cst_24 = arith.constant dense<0.000000e+00> : vector<16x32xf32>
    %84 = tpu.matmul %83, %82, %cst_24 {dimension_numbers = #tpu.dot_dimension_numbers<[1], [0], [0], [1], [0, 0, 1, 1], [], []>} : vector<16x32xbf16>, vector<32x32xbf16>, vector<16x32xf32> -> vector<16x32xf32>
    %85 = vector.extract_strided_slice %81 {offsets = [0, 0], sizes = [1, 32], strides = [1, 1]} : vector<1x96xf32> to vector<1x32xf32>
    %86 = vector.broadcast %85 : vector<1x32xf32> to vector<16x32xf32>
    %87 = arith.addf %84, %86 : vector<16x32xf32>
    %88 = vector.extract_strided_slice %80 {offsets = [0, 32], sizes = [32, 64], strides = [1, 1]} : vector<32x96xbf16> to vector<32x64xbf16>
    %89 = arith.truncf %0 : vector<18x32xf32> to vector<18x32xbf16>
    %cst_25 = arith.constant dense<0.000000e+00> : vector<18x64xf32>
    %90 = tpu.matmul %89, %88, %cst_25 {dimension_numbers = #tpu.dot_dimension_numbers<[1], [0], [0], [1], [0, 0, 1, 1], [], []>} : vector<18x32xbf16>, vector<32x64xbf16>, vector<18x64xf32> -> vector<18x64xf32>
    %91 = vector.extract_strided_slice %81 {offsets = [0, 32], sizes = [1, 64], strides = [1, 1]} : vector<1x96xf32> to vector<1x64xf32>
    %92 = vector.broadcast %91 : vector<1x64xf32> to vector<18x64xf32>
    %93 = arith.addf %90, %92 : vector<18x64xf32>
    %94 = vector.extract_strided_slice %87 {offsets = [0, 0], sizes = [16, 8], strides = [1, 1]} : vector<16x32xf32> to vector<16x8xf32>
    %95 = vector.extract_strided_slice %87 {offsets = [0, 8], sizes = [16, 8], strides = [1, 1]} : vector<16x32xf32> to vector<16x8xf32>
    %96 = vector.extract_strided_slice %87 {offsets = [0, 16], sizes = [16, 8], strides = [1, 1]} : vector<16x32xf32> to vector<16x8xf32>
    %97 = vector.extract_strided_slice %87 {offsets = [0, 24], sizes = [16, 8], strides = [1, 1]} : vector<16x32xf32> to vector<16x8xf32>
    %98 = tpu.concatenate %94, %95, %96, %97 in 0 : vector<16x8xf32>, vector<16x8xf32>, vector<16x8xf32>, vector<16x8xf32> -> vector<64x8xf32>
    %99 = vector.extract_strided_slice %93 {offsets = [0, 0], sizes = [18, 32], strides = [1, 1]} : vector<18x64xf32> to vector<18x32xf32>
    %100 = vector.extract_strided_slice %99 {offsets = [0, 0], sizes = [18, 8], strides = [1, 1]} : vector<18x32xf32> to vector<18x8xf32>
    %101 = vector.extract_strided_slice %99 {offsets = [0, 8], sizes = [18, 8], strides = [1, 1]} : vector<18x32xf32> to vector<18x8xf32>
    %102 = vector.extract_strided_slice %99 {offsets = [0, 16], sizes = [18, 8], strides = [1, 1]} : vector<18x32xf32> to vector<18x8xf32>
    %103 = vector.extract_strided_slice %99 {offsets = [0, 24], sizes = [18, 8], strides = [1, 1]} : vector<18x32xf32> to vector<18x8xf32>
    %104 = tpu.concatenate %100, %101, %102, %103 in 0 : vector<18x8xf32>, vector<18x8xf32>, vector<18x8xf32>, vector<18x8xf32> -> vector<72x8xf32>
    %105 = vector.extract_strided_slice %93 {offsets = [0, 32], sizes = [18, 32], strides = [1, 1]} : vector<18x64xf32> to vector<18x32xf32>
    %106 = vector.extract_strided_slice %105 {offsets = [0, 0], sizes = [18, 8], strides = [1, 1]} : vector<18x32xf32> to vector<18x8xf32>
    %107 = vector.extract_strided_slice %105 {offsets = [0, 8], sizes = [18, 8], strides = [1, 1]} : vector<18x32xf32> to vector<18x8xf32>
    %108 = vector.extract_strided_slice %105 {offsets = [0, 16], sizes = [18, 8], strides = [1, 1]} : vector<18x32xf32> to vector<18x8xf32>
    %109 = vector.extract_strided_slice %105 {offsets = [0, 24], sizes = [18, 8], strides = [1, 1]} : vector<18x32xf32> to vector<18x8xf32>
    %110 = tpu.concatenate %106, %107, %108, %109 in 0 : vector<18x8xf32>, vector<18x8xf32>, vector<18x8xf32>, vector<18x8xf32> -> vector<72x8xf32>
    %c24 = arith.constant 24 : index
    %c0_26 = arith.constant 0 : index
    %111 = vector.load %arg0[%c24, %c0_26] : memref<272x128xf32, #tpu.memory_space<vmem>>, vector<1x32xf32>
    %112 = arith.truncf %98 : vector<64x8xf32> to vector<64x8xbf16>
    %113 = arith.truncf %104 : vector<72x8xf32> to vector<72x8xbf16>
    %cst_27 = arith.constant dense<0.000000e+00> : vector<64x72xf32>
    %114 = tpu.matmul %112, %113, %cst_27 {dimension_numbers = #tpu.dot_dimension_numbers<[1], [1], [0], [0], [0, 0, 1, 0], [], []>} : vector<64x8xbf16>, vector<72x8xbf16>, vector<64x72xf32> -> vector<64x72xf32>
    %115 = arith.addf %114, %3 : vector<64x72xf32>
    %cst_28 = arith.constant dense<0xFF800000> : vector<64xf32>
    %116 = vector.multi_reduction <maximumf>, %115, %cst_28 [1] : vector<64x72xf32> to vector<64xf32>
    %117 = vector.shape_cast %116 : vector<64xf32> to vector<64x1xf32>
    %118 = vector.broadcast %117 : vector<64x1xf32> to vector<64x72xf32>
    %119 = arith.subf %115, %118 : vector<64x72xf32>
    %120 = math.exp %119 : vector<64x72xf32>
    %cst_29 = arith.constant dense<0.000000e+00> : vector<64xf32>
    %121 = vector.multi_reduction <add>, %120, %cst_29 [1] : vector<64x72xf32> to vector<64xf32>
    %122 = vector.shape_cast %121 : vector<64xf32> to vector<64x1xf32>
    %123 = tpu.reciprocal %122 {approx = true} : vector<64x1xf32> -> vector<64x1xf32>
    %124 = vector.broadcast %123 : vector<64x1xf32> to vector<64x72xf32>
    %125 = arith.mulf %120, %124 : vector<64x72xf32>
    %126 = arith.truncf %125 : vector<64x72xf32> to vector<64x72xbf16>
    %127 = arith.truncf %110 : vector<72x8xf32> to vector<72x8xbf16>
    %cst_30 = arith.constant dense<0.000000e+00> : vector<64x8xf32>
    %128 = tpu.matmul %126, %127, %cst_30 {dimension_numbers = #tpu.dot_dimension_numbers<[1], [0], [0], [1], [0, 0, 1, 1], [], []>} : vector<64x72xbf16>, vector<72x8xbf16>, vector<64x8xf32> -> vector<64x8xf32>
    %129 = vector.extract_strided_slice %128 {offsets = [0, 0], sizes = [16, 8], strides = [1, 1]} : vector<64x8xf32> to vector<16x8xf32>
    %130 = vector.extract_strided_slice %128 {offsets = [16, 0], sizes = [16, 8], strides = [1, 1]} : vector<64x8xf32> to vector<16x8xf32>
    %131 = vector.extract_strided_slice %128 {offsets = [32, 0], sizes = [16, 8], strides = [1, 1]} : vector<64x8xf32> to vector<16x8xf32>
    %132 = vector.extract_strided_slice %128 {offsets = [48, 0], sizes = [16, 8], strides = [1, 1]} : vector<64x8xf32> to vector<16x8xf32>
    %133 = tpu.concatenate %129, %130, %131, %132 in 1 : vector<16x8xf32>, vector<16x8xf32>, vector<16x8xf32>, vector<16x8xf32> -> vector<16x32xf32>
    %c96 = arith.constant 96 : index
    %c0_31 = arith.constant 0 : index
    %134 = vector.load %arg1[%c96, %c0_31] : memref<480x128xbf16, #tpu.memory_space<vmem>>, vector<32x32xbf16>
    %135 = arith.truncf %133 : vector<16x32xf32> to vector<16x32xbf16>
    %cst_32 = arith.constant dense<0.000000e+00> : vector<16x32xf32>
    %136 = tpu.matmul %135, %134, %cst_32 {dimension_numbers = #tpu.dot_dimension_numbers<[1], [0], [0], [1], [0, 0, 1, 1], [], []>} : vector<16x32xbf16>, vector<32x32xbf16>, vector<16x32xf32> -> vector<16x32xf32>
    %137 = vector.broadcast %111 : vector<1x32xf32> to vector<16x32xf32>
    %138 = arith.addf %136, %137 : vector<16x32xf32>
    %139 = arith.addf %79, %138 : vector<16x32xf32>
    %140 = vector.extract_strided_slice %4 {offsets = [2, 0], sizes = [1, 32], strides = [1, 1]} : vector<6x32xf32> to vector<1x32xf32>
    %141 = vector.extract_strided_slice %4 {offsets = [3, 0], sizes = [1, 32], strides = [1, 1]} : vector<6x32xf32> to vector<1x32xf32>
    %cst_33 = arith.constant dense<0.000000e+00> : vector<16xf32>
    %142 = vector.multi_reduction <add>, %139, %cst_33 [1] : vector<16x32xf32> to vector<16xf32>
    %143 = vector.shape_cast %142 : vector<16xf32> to vector<16x1xf32>
    %cst_34 = arith.constant 3.200000e+01 : f32
    %144 = vector.broadcast %cst_34 : f32 to vector<16x1xf32>
    %145 = arith.divf %143, %144 : vector<16x1xf32>
    %146 = vector.broadcast %145 : vector<16x1xf32> to vector<16x32xf32>
    %147 = arith.subf %139, %146 : vector<16x32xf32>
    %148 = arith.mulf %147, %147 : vector<16x32xf32>
    %cst_35 = arith.constant dense<0.000000e+00> : vector<16xf32>
    %149 = vector.multi_reduction <add>, %148, %cst_35 [1] : vector<16x32xf32> to vector<16xf32>
    %150 = vector.shape_cast %149 : vector<16xf32> to vector<16x1xf32>
    %cst_36 = arith.constant 3.200000e+01 : f32
    %151 = vector.broadcast %cst_36 : f32 to vector<16x1xf32>
    %152 = arith.divf %150, %151 : vector<16x1xf32>
    %cst_37 = arith.constant 9.99999974E-6 : f32
    %153 = vector.broadcast %cst_37 : f32 to vector<16x1xf32>
    %154 = arith.addf %152, %153 : vector<16x1xf32>
    %155 = math.rsqrt %154 : vector<16x1xf32>
    %156 = vector.broadcast %155 : vector<16x1xf32> to vector<16x32xf32>
    %157 = arith.mulf %147, %156 : vector<16x32xf32>
    %158 = vector.broadcast %140 : vector<1x32xf32> to vector<16x32xf32>
    %159 = arith.mulf %157, %158 : vector<16x32xf32>
    %160 = vector.broadcast %141 : vector<1x32xf32> to vector<16x32xf32>
    %161 = arith.addf %159, %160 : vector<16x32xf32>
    %c128_38 = arith.constant 128 : index
    %c0_39 = arith.constant 0 : index
    %162 = vector.load %arg1[%c128_38, %c0_39] : memref<480x128xbf16, #tpu.memory_space<vmem>>, vector<32x64xbf16>
    %163 = arith.truncf %161 : vector<16x32xf32> to vector<16x32xbf16>
    %cst_40 = arith.constant dense<0.000000e+00> : vector<16x64xf32>
    %164 = tpu.matmul %163, %162, %cst_40 {dimension_numbers = #tpu.dot_dimension_numbers<[1], [0], [0], [1], [0, 0, 1, 1], [], []>} : vector<16x32xbf16>, vector<32x64xbf16>, vector<16x64xf32> -> vector<16x64xf32>
    %c40 = arith.constant 40 : index
    %c0_41 = arith.constant 0 : index
    %165 = vector.load %arg0[%c40, %c0_41] : memref<272x128xf32, #tpu.memory_space<vmem>>, vector<1x64xf32>
    %166 = vector.broadcast %165 : vector<1x64xf32> to vector<16x64xf32>
    %167 = arith.addf %164, %166 : vector<16x64xf32>
    %cst_42 = arith.constant 0.000000e+00 : f32
    %168 = vector.broadcast %cst_42 : f32 to vector<16x64xf32>
    %169 = arith.maximumf %167, %168 : vector<16x64xf32>
    %c160 = arith.constant 160 : index
    %c0_43 = arith.constant 0 : index
    %170 = vector.load %arg1[%c160, %c0_43] : memref<480x128xbf16, #tpu.memory_space<vmem>>, vector<64x32xbf16>
    %171 = arith.truncf %169 : vector<16x64xf32> to vector<16x64xbf16>
    %cst_44 = arith.constant dense<0.000000e+00> : vector<16x32xf32>
    %172 = tpu.matmul %171, %170, %cst_44 {dimension_numbers = #tpu.dot_dimension_numbers<[1], [0], [0], [1], [0, 0, 1, 1], [], []>} : vector<16x64xbf16>, vector<64x32xbf16>, vector<16x32xf32> -> vector<16x32xf32>
    %c48 = arith.constant 48 : index
    %c0_45 = arith.constant 0 : index
    %173 = vector.load %arg0[%c48, %c0_45] : memref<272x128xf32, #tpu.memory_space<vmem>>, vector<1x32xf32>
    %174 = vector.broadcast %173 : vector<1x32xf32> to vector<16x32xf32>
    %175 = arith.addf %172, %174 : vector<16x32xf32>
    %176 = arith.addf %161, %175 : vector<16x32xf32>
    %177 = vector.extract_strided_slice %4 {offsets = [4, 0], sizes = [1, 32], strides = [1, 1]} : vector<6x32xf32> to vector<1x32xf32>
    %178 = vector.extract_strided_slice %4 {offsets = [5, 0], sizes = [1, 32], strides = [1, 1]} : vector<6x32xf32> to vector<1x32xf32>
    %cst_46 = arith.constant dense<0.000000e+00> : vector<16xf32>
    %179 = vector.multi_reduction <add>, %176, %cst_46 [1] : vector<16x32xf32> to vector<16xf32>
    %180 = vector.shape_cast %179 : vector<16xf32> to vector<16x1xf32>
    %cst_47 = arith.constant 3.200000e+01 : f32
    %181 = vector.broadcast %cst_47 : f32 to vector<16x1xf32>
    %182 = arith.divf %180, %181 : vector<16x1xf32>
    %183 = vector.broadcast %182 : vector<16x1xf32> to vector<16x32xf32>
    %184 = arith.subf %176, %183 : vector<16x32xf32>
    %185 = arith.mulf %184, %184 : vector<16x32xf32>
    %cst_48 = arith.constant dense<0.000000e+00> : vector<16xf32>
    %186 = vector.multi_reduction <add>, %185, %cst_48 [1] : vector<16x32xf32> to vector<16xf32>
    %187 = vector.shape_cast %186 : vector<16xf32> to vector<16x1xf32>
    %cst_49 = arith.constant 3.200000e+01 : f32
    %188 = vector.broadcast %cst_49 : f32 to vector<16x1xf32>
    %189 = arith.divf %187, %188 : vector<16x1xf32>
    %cst_50 = arith.constant 9.99999974E-6 : f32
    %190 = vector.broadcast %cst_50 : f32 to vector<16x1xf32>
    %191 = arith.addf %189, %190 : vector<16x1xf32>
    %192 = math.rsqrt %191 : vector<16x1xf32>
    %193 = vector.broadcast %192 : vector<16x1xf32> to vector<16x32xf32>
    %194 = arith.mulf %184, %193 : vector<16x32xf32>
    %195 = vector.broadcast %177 : vector<1x32xf32> to vector<16x32xf32>
    %196 = arith.mulf %194, %195 : vector<16x32xf32>
    %197 = vector.broadcast %178 : vector<1x32xf32> to vector<16x32xf32>
    %198 = arith.addf %196, %197 : vector<16x32xf32>
    %c88 = arith.constant 88 : index
    %c0_51 = arith.constant 0 : index
    %199 = vector.load %arg0[%c88, %c0_51] : memref<272x128xf32, #tpu.memory_space<vmem>>, vector<6x32xf32>
    %c224 = arith.constant 224 : index
    %c0_52 = arith.constant 0 : index
    %200 = vector.load %arg1[%c224, %c0_52] : memref<480x128xbf16, #tpu.memory_space<vmem>>, vector<32x96xbf16>
    %201 = arith.truncf %198 : vector<16x32xf32> to vector<16x32xbf16>
    %cst_53 = arith.constant dense<0.000000e+00> : vector<16x96xf32>
    %202 = tpu.matmul %201, %200, %cst_53 {dimension_numbers = #tpu.dot_dimension_numbers<[1], [0], [0], [1], [0, 0, 1, 1], [], []>} : vector<16x32xbf16>, vector<32x96xbf16>, vector<16x96xf32> -> vector<16x96xf32>
    %c56 = arith.constant 56 : index
    %c0_54 = arith.constant 0 : index
    %203 = vector.load %arg0[%c56, %c0_54] : memref<272x128xf32, #tpu.memory_space<vmem>>, vector<1x96xf32>
    %204 = vector.broadcast %203 : vector<1x96xf32> to vector<16x96xf32>
    %205 = arith.addf %202, %204 : vector<16x96xf32>
    %206 = vector.extract_strided_slice %205 {offsets = [0, 0], sizes = [16, 32], strides = [1, 1]} : vector<16x96xf32> to vector<16x32xf32>
    %207 = vector.extract_strided_slice %206 {offsets = [0, 0], sizes = [16, 8], strides = [1, 1]} : vector<16x32xf32> to vector<16x8xf32>
    %208 = vector.extract_strided_slice %206 {offsets = [0, 8], sizes = [16, 8], strides = [1, 1]} : vector<16x32xf32> to vector<16x8xf32>
    %209 = vector.extract_strided_slice %206 {offsets = [0, 16], sizes = [16, 8], strides = [1, 1]} : vector<16x32xf32> to vector<16x8xf32>
    %210 = vector.extract_strided_slice %206 {offsets = [0, 24], sizes = [16, 8], strides = [1, 1]} : vector<16x32xf32> to vector<16x8xf32>
    %211 = tpu.concatenate %207, %208, %209, %210 in 0 : vector<16x8xf32>, vector<16x8xf32>, vector<16x8xf32>, vector<16x8xf32> -> vector<64x8xf32>
    %212 = vector.extract_strided_slice %205 {offsets = [0, 32], sizes = [16, 32], strides = [1, 1]} : vector<16x96xf32> to vector<16x32xf32>
    %213 = vector.extract_strided_slice %212 {offsets = [0, 0], sizes = [16, 8], strides = [1, 1]} : vector<16x32xf32> to vector<16x8xf32>
    %214 = vector.extract_strided_slice %212 {offsets = [0, 8], sizes = [16, 8], strides = [1, 1]} : vector<16x32xf32> to vector<16x8xf32>
    %215 = vector.extract_strided_slice %212 {offsets = [0, 16], sizes = [16, 8], strides = [1, 1]} : vector<16x32xf32> to vector<16x8xf32>
    %216 = vector.extract_strided_slice %212 {offsets = [0, 24], sizes = [16, 8], strides = [1, 1]} : vector<16x32xf32> to vector<16x8xf32>
    %217 = tpu.concatenate %213, %214, %215, %216 in 0 : vector<16x8xf32>, vector<16x8xf32>, vector<16x8xf32>, vector<16x8xf32> -> vector<64x8xf32>
    %218 = vector.extract_strided_slice %205 {offsets = [0, 64], sizes = [16, 32], strides = [1, 1]} : vector<16x96xf32> to vector<16x32xf32>
    %219 = vector.extract_strided_slice %218 {offsets = [0, 0], sizes = [16, 8], strides = [1, 1]} : vector<16x32xf32> to vector<16x8xf32>
    %220 = vector.extract_strided_slice %218 {offsets = [0, 8], sizes = [16, 8], strides = [1, 1]} : vector<16x32xf32> to vector<16x8xf32>
    %221 = vector.extract_strided_slice %218 {offsets = [0, 16], sizes = [16, 8], strides = [1, 1]} : vector<16x32xf32> to vector<16x8xf32>
    %222 = vector.extract_strided_slice %218 {offsets = [0, 24], sizes = [16, 8], strides = [1, 1]} : vector<16x32xf32> to vector<16x8xf32>
    %223 = tpu.concatenate %219, %220, %221, %222 in 0 : vector<16x8xf32>, vector<16x8xf32>, vector<16x8xf32>, vector<16x8xf32> -> vector<64x8xf32>
    %c72 = arith.constant 72 : index
    %c0_55 = arith.constant 0 : index
    %224 = vector.load %arg0[%c72, %c0_55] : memref<272x128xf32, #tpu.memory_space<vmem>>, vector<1x32xf32>
    %225 = arith.truncf %211 : vector<64x8xf32> to vector<64x8xbf16>
    %226 = arith.truncf %217 : vector<64x8xf32> to vector<64x8xbf16>
    %cst_56 = arith.constant dense<0.000000e+00> : vector<64x64xf32>
    %227 = tpu.matmul %225, %226, %cst_56 {dimension_numbers = #tpu.dot_dimension_numbers<[1], [1], [0], [0], [0, 0, 1, 0], [], []>} : vector<64x8xbf16>, vector<64x8xbf16>, vector<64x64xf32> -> vector<64x64xf32>
    %228 = arith.addf %227, %2 : vector<64x64xf32>
    %cst_57 = arith.constant dense<0xFF800000> : vector<64xf32>
    %229 = vector.multi_reduction <maximumf>, %228, %cst_57 [1] : vector<64x64xf32> to vector<64xf32>
    %230 = vector.shape_cast %229 : vector<64xf32> to vector<64x1xf32>
    %231 = vector.broadcast %230 : vector<64x1xf32> to vector<64x64xf32>
    %232 = arith.subf %228, %231 : vector<64x64xf32>
    %233 = math.exp %232 : vector<64x64xf32>
    %cst_58 = arith.constant dense<0.000000e+00> : vector<64xf32>
    %234 = vector.multi_reduction <add>, %233, %cst_58 [1] : vector<64x64xf32> to vector<64xf32>
    %235 = vector.shape_cast %234 : vector<64xf32> to vector<64x1xf32>
    %236 = tpu.reciprocal %235 {approx = true} : vector<64x1xf32> -> vector<64x1xf32>
    %237 = vector.broadcast %236 : vector<64x1xf32> to vector<64x64xf32>
    %238 = arith.mulf %233, %237 : vector<64x64xf32>
    %239 = arith.truncf %238 : vector<64x64xf32> to vector<64x64xbf16>
    %240 = arith.truncf %223 : vector<64x8xf32> to vector<64x8xbf16>
    %cst_59 = arith.constant dense<0.000000e+00> : vector<64x8xf32>
    %241 = tpu.matmul %239, %240, %cst_59 {dimension_numbers = #tpu.dot_dimension_numbers<[1], [0], [0], [1], [0, 0, 1, 1], [], []>} : vector<64x64xbf16>, vector<64x8xbf16>, vector<64x8xf32> -> vector<64x8xf32>
    %242 = vector.extract_strided_slice %241 {offsets = [0, 0], sizes = [16, 8], strides = [1, 1]} : vector<64x8xf32> to vector<16x8xf32>
    %243 = vector.extract_strided_slice %241 {offsets = [16, 0], sizes = [16, 8], strides = [1, 1]} : vector<64x8xf32> to vector<16x8xf32>
    %244 = vector.extract_strided_slice %241 {offsets = [32, 0], sizes = [16, 8], strides = [1, 1]} : vector<64x8xf32> to vector<16x8xf32>
    %245 = vector.extract_strided_slice %241 {offsets = [48, 0], sizes = [16, 8], strides = [1, 1]} : vector<64x8xf32> to vector<16x8xf32>
    %246 = tpu.concatenate %242, %243, %244, %245 in 1 : vector<16x8xf32>, vector<16x8xf32>, vector<16x8xf32>, vector<16x8xf32> -> vector<16x32xf32>
    %c288 = arith.constant 288 : index
    %c0_60 = arith.constant 0 : index
    %247 = vector.load %arg1[%c288, %c0_60] : memref<480x128xbf16, #tpu.memory_space<vmem>>, vector<32x32xbf16>
    %248 = arith.truncf %246 : vector<16x32xf32> to vector<16x32xbf16>
    %cst_61 = arith.constant dense<0.000000e+00> : vector<16x32xf32>
    %249 = tpu.matmul %248, %247, %cst_61 {dimension_numbers = #tpu.dot_dimension_numbers<[1], [0], [0], [1], [0, 0, 1, 1], [], []>} : vector<16x32xbf16>, vector<32x32xbf16>, vector<16x32xf32> -> vector<16x32xf32>
    %250 = vector.broadcast %224 : vector<1x32xf32> to vector<16x32xf32>
    %251 = arith.addf %249, %250 : vector<16x32xf32>
    %252 = arith.addf %198, %251 : vector<16x32xf32>
    %253 = vector.extract_strided_slice %199 {offsets = [0, 0], sizes = [1, 32], strides = [1, 1]} : vector<6x32xf32> to vector<1x32xf32>
    %254 = vector.extract_strided_slice %199 {offsets = [1, 0], sizes = [1, 32], strides = [1, 1]} : vector<6x32xf32> to vector<1x32xf32>
    %cst_62 = arith.constant dense<0.000000e+00> : vector<16xf32>
    %255 = vector.multi_reduction <add>, %252, %cst_62 [1] : vector<16x32xf32> to vector<16xf32>
    %256 = vector.shape_cast %255 : vector<16xf32> to vector<16x1xf32>
    %cst_63 = arith.constant 3.200000e+01 : f32
    %257 = vector.broadcast %cst_63 : f32 to vector<16x1xf32>
    %258 = arith.divf %256, %257 : vector<16x1xf32>
    %259 = vector.broadcast %258 : vector<16x1xf32> to vector<16x32xf32>
    %260 = arith.subf %252, %259 : vector<16x32xf32>
    %261 = arith.mulf %260, %260 : vector<16x32xf32>
    %cst_64 = arith.constant dense<0.000000e+00> : vector<16xf32>
    %262 = vector.multi_reduction <add>, %261, %cst_64 [1] : vector<16x32xf32> to vector<16xf32>
    %263 = vector.shape_cast %262 : vector<16xf32> to vector<16x1xf32>
    %cst_65 = arith.constant 3.200000e+01 : f32
    %264 = vector.broadcast %cst_65 : f32 to vector<16x1xf32>
    %265 = arith.divf %263, %264 : vector<16x1xf32>
    %cst_66 = arith.constant 9.99999974E-6 : f32
    %266 = vector.broadcast %cst_66 : f32 to vector<16x1xf32>
    %267 = arith.addf %265, %266 : vector<16x1xf32>
    %268 = math.rsqrt %267 : vector<16x1xf32>
    %269 = vector.broadcast %268 : vector<16x1xf32> to vector<16x32xf32>
    %270 = arith.mulf %260, %269 : vector<16x32xf32>
    %271 = vector.broadcast %253 : vector<1x32xf32> to vector<16x32xf32>
    %272 = arith.mulf %270, %271 : vector<16x32xf32>
    %273 = vector.broadcast %254 : vector<1x32xf32> to vector<16x32xf32>
    %274 = arith.addf %272, %273 : vector<16x32xf32>
    %c256 = arith.constant 256 : index
    %c0_67 = arith.constant 0 : index
    %275 = vector.load %arg1[%c256, %c0_67] : memref<480x128xbf16, #tpu.memory_space<vmem>>, vector<32x96xbf16>
    %c64_68 = arith.constant 64 : index
    %c0_69 = arith.constant 0 : index
    %276 = vector.load %arg0[%c64_68, %c0_69] : memref<272x128xf32, #tpu.memory_space<vmem>>, vector<1x96xf32>
    %277 = vector.extract_strided_slice %275 {offsets = [0, 0], sizes = [32, 32], strides = [1, 1]} : vector<32x96xbf16> to vector<32x32xbf16>
    %278 = arith.truncf %274 : vector<16x32xf32> to vector<16x32xbf16>
    %cst_70 = arith.constant dense<0.000000e+00> : vector<16x32xf32>
    %279 = tpu.matmul %278, %277, %cst_70 {dimension_numbers = #tpu.dot_dimension_numbers<[1], [0], [0], [1], [0, 0, 1, 1], [], []>} : vector<16x32xbf16>, vector<32x32xbf16>, vector<16x32xf32> -> vector<16x32xf32>
    %280 = vector.extract_strided_slice %276 {offsets = [0, 0], sizes = [1, 32], strides = [1, 1]} : vector<1x96xf32> to vector<1x32xf32>
    %281 = vector.broadcast %280 : vector<1x32xf32> to vector<16x32xf32>
    %282 = arith.addf %279, %281 : vector<16x32xf32>
    %283 = vector.extract_strided_slice %275 {offsets = [0, 32], sizes = [32, 64], strides = [1, 1]} : vector<32x96xbf16> to vector<32x64xbf16>
    %284 = arith.truncf %0 : vector<18x32xf32> to vector<18x32xbf16>
    %cst_71 = arith.constant dense<0.000000e+00> : vector<18x64xf32>
    %285 = tpu.matmul %284, %283, %cst_71 {dimension_numbers = #tpu.dot_dimension_numbers<[1], [0], [0], [1], [0, 0, 1, 1], [], []>} : vector<18x32xbf16>, vector<32x64xbf16>, vector<18x64xf32> -> vector<18x64xf32>
    %286 = vector.extract_strided_slice %276 {offsets = [0, 32], sizes = [1, 64], strides = [1, 1]} : vector<1x96xf32> to vector<1x64xf32>
    %287 = vector.broadcast %286 : vector<1x64xf32> to vector<18x64xf32>
    %288 = arith.addf %285, %287 : vector<18x64xf32>
    %289 = vector.extract_strided_slice %282 {offsets = [0, 0], sizes = [16, 8], strides = [1, 1]} : vector<16x32xf32> to vector<16x8xf32>
    %290 = vector.extract_strided_slice %282 {offsets = [0, 8], sizes = [16, 8], strides = [1, 1]} : vector<16x32xf32> to vector<16x8xf32>
    %291 = vector.extract_strided_slice %282 {offsets = [0, 16], sizes = [16, 8], strides = [1, 1]} : vector<16x32xf32> to vector<16x8xf32>
    %292 = vector.extract_strided_slice %282 {offsets = [0, 24], sizes = [16, 8], strides = [1, 1]} : vector<16x32xf32> to vector<16x8xf32>
    %293 = tpu.concatenate %289, %290, %291, %292 in 0 : vector<16x8xf32>, vector<16x8xf32>, vector<16x8xf32>, vector<16x8xf32> -> vector<64x8xf32>
    %294 = vector.extract_strided_slice %288 {offsets = [0, 0], sizes = [18, 32], strides = [1, 1]} : vector<18x64xf32> to vector<18x32xf32>
    %295 = vector.extract_strided_slice %294 {offsets = [0, 0], sizes = [18, 8], strides = [1, 1]} : vector<18x32xf32> to vector<18x8xf32>
    %296 = vector.extract_strided_slice %294 {offsets = [0, 8], sizes = [18, 8], strides = [1, 1]} : vector<18x32xf32> to vector<18x8xf32>
    %297 = vector.extract_strided_slice %294 {offsets = [0, 16], sizes = [18, 8], strides = [1, 1]} : vector<18x32xf32> to vector<18x8xf32>
    %298 = vector.extract_strided_slice %294 {offsets = [0, 24], sizes = [18, 8], strides = [1, 1]} : vector<18x32xf32> to vector<18x8xf32>
    %299 = tpu.concatenate %295, %296, %297, %298 in 0 : vector<18x8xf32>, vector<18x8xf32>, vector<18x8xf32>, vector<18x8xf32> -> vector<72x8xf32>
    %300 = vector.extract_strided_slice %288 {offsets = [0, 32], sizes = [18, 32], strides = [1, 1]} : vector<18x64xf32> to vector<18x32xf32>
    %301 = vector.extract_strided_slice %300 {offsets = [0, 0], sizes = [18, 8], strides = [1, 1]} : vector<18x32xf32> to vector<18x8xf32>
    %302 = vector.extract_strided_slice %300 {offsets = [0, 8], sizes = [18, 8], strides = [1, 1]} : vector<18x32xf32> to vector<18x8xf32>
    %303 = vector.extract_strided_slice %300 {offsets = [0, 16], sizes = [18, 8], strides = [1, 1]} : vector<18x32xf32> to vector<18x8xf32>
    %304 = vector.extract_strided_slice %300 {offsets = [0, 24], sizes = [18, 8], strides = [1, 1]} : vector<18x32xf32> to vector<18x8xf32>
    %305 = tpu.concatenate %301, %302, %303, %304 in 0 : vector<18x8xf32>, vector<18x8xf32>, vector<18x8xf32>, vector<18x8xf32> -> vector<72x8xf32>
    %c80 = arith.constant 80 : index
    %c0_72 = arith.constant 0 : index
    %306 = vector.load %arg0[%c80, %c0_72] : memref<272x128xf32, #tpu.memory_space<vmem>>, vector<1x32xf32>
    %307 = arith.truncf %293 : vector<64x8xf32> to vector<64x8xbf16>
    %308 = arith.truncf %299 : vector<72x8xf32> to vector<72x8xbf16>
    %cst_73 = arith.constant dense<0.000000e+00> : vector<64x72xf32>
    %309 = tpu.matmul %307, %308, %cst_73 {dimension_numbers = #tpu.dot_dimension_numbers<[1], [1], [0], [0], [0, 0, 1, 0], [], []>} : vector<64x8xbf16>, vector<72x8xbf16>, vector<64x72xf32> -> vector<64x72xf32>
    %310 = arith.addf %309, %3 : vector<64x72xf32>
    %cst_74 = arith.constant dense<0xFF800000> : vector<64xf32>
    %311 = vector.multi_reduction <maximumf>, %310, %cst_74 [1] : vector<64x72xf32> to vector<64xf32>
    %312 = vector.shape_cast %311 : vector<64xf32> to vector<64x1xf32>
    %313 = vector.broadcast %312 : vector<64x1xf32> to vector<64x72xf32>
    %314 = arith.subf %310, %313 : vector<64x72xf32>
    %315 = math.exp %314 : vector<64x72xf32>
    %cst_75 = arith.constant dense<0.000000e+00> : vector<64xf32>
    %316 = vector.multi_reduction <add>, %315, %cst_75 [1] : vector<64x72xf32> to vector<64xf32>
    %317 = vector.shape_cast %316 : vector<64xf32> to vector<64x1xf32>
    %318 = tpu.reciprocal %317 {approx = true} : vector<64x1xf32> -> vector<64x1xf32>
    %319 = vector.broadcast %318 : vector<64x1xf32> to vector<64x72xf32>
    %320 = arith.mulf %315, %319 : vector<64x72xf32>
    %321 = arith.truncf %320 : vector<64x72xf32> to vector<64x72xbf16>
    %322 = arith.truncf %305 : vector<72x8xf32> to vector<72x8xbf16>
    %cst_76 = arith.constant dense<0.000000e+00> : vector<64x8xf32>
    %323 = tpu.matmul %321, %322, %cst_76 {dimension_numbers = #tpu.dot_dimension_numbers<[1], [0], [0], [1], [0, 0, 1, 1], [], []>} : vector<64x72xbf16>, vector<72x8xbf16>, vector<64x8xf32> -> vector<64x8xf32>
    %324 = vector.extract_strided_slice %323 {offsets = [0, 0], sizes = [16, 8], strides = [1, 1]} : vector<64x8xf32> to vector<16x8xf32>
    %325 = vector.extract_strided_slice %323 {offsets = [16, 0], sizes = [16, 8], strides = [1, 1]} : vector<64x8xf32> to vector<16x8xf32>
    %326 = vector.extract_strided_slice %323 {offsets = [32, 0], sizes = [16, 8], strides = [1, 1]} : vector<64x8xf32> to vector<16x8xf32>
    %327 = vector.extract_strided_slice %323 {offsets = [48, 0], sizes = [16, 8], strides = [1, 1]} : vector<64x8xf32> to vector<16x8xf32>
    %328 = tpu.concatenate %324, %325, %326, %327 in 1 : vector<16x8xf32>, vector<16x8xf32>, vector<16x8xf32>, vector<16x8xf32> -> vector<16x32xf32>
    %c320 = arith.constant 320 : index
    %c0_77 = arith.constant 0 : index
    %329 = vector.load %arg1[%c320, %c0_77] : memref<480x128xbf16, #tpu.memory_space<vmem>>, vector<32x32xbf16>
    %330 = arith.truncf %328 : vector<16x32xf32> to vector<16x32xbf16>
    %cst_78 = arith.constant dense<0.000000e+00> : vector<16x32xf32>
    %331 = tpu.matmul %330, %329, %cst_78 {dimension_numbers = #tpu.dot_dimension_numbers<[1], [0], [0], [1], [0, 0, 1, 1], [], []>} : vector<16x32xbf16>, vector<32x32xbf16>, vector<16x32xf32> -> vector<16x32xf32>
    %332 = vector.broadcast %306 : vector<1x32xf32> to vector<16x32xf32>
    %333 = arith.addf %331, %332 : vector<16x32xf32>
    %334 = arith.addf %274, %333 : vector<16x32xf32>
    %335 = vector.extract_strided_slice %199 {offsets = [2, 0], sizes = [1, 32], strides = [1, 1]} : vector<6x32xf32> to vector<1x32xf32>
    %336 = vector.extract_strided_slice %199 {offsets = [3, 0], sizes = [1, 32], strides = [1, 1]} : vector<6x32xf32> to vector<1x32xf32>
    %cst_79 = arith.constant dense<0.000000e+00> : vector<16xf32>
    %337 = vector.multi_reduction <add>, %334, %cst_79 [1] : vector<16x32xf32> to vector<16xf32>
    %338 = vector.shape_cast %337 : vector<16xf32> to vector<16x1xf32>
    %cst_80 = arith.constant 3.200000e+01 : f32
    %339 = vector.broadcast %cst_80 : f32 to vector<16x1xf32>
    %340 = arith.divf %338, %339 : vector<16x1xf32>
    %341 = vector.broadcast %340 : vector<16x1xf32> to vector<16x32xf32>
    %342 = arith.subf %334, %341 : vector<16x32xf32>
    %343 = arith.mulf %342, %342 : vector<16x32xf32>
    %cst_81 = arith.constant dense<0.000000e+00> : vector<16xf32>
    %344 = vector.multi_reduction <add>, %343, %cst_81 [1] : vector<16x32xf32> to vector<16xf32>
    %345 = vector.shape_cast %344 : vector<16xf32> to vector<16x1xf32>
    %cst_82 = arith.constant 3.200000e+01 : f32
    %346 = vector.broadcast %cst_82 : f32 to vector<16x1xf32>
    %347 = arith.divf %345, %346 : vector<16x1xf32>
    %cst_83 = arith.constant 9.99999974E-6 : f32
    %348 = vector.broadcast %cst_83 : f32 to vector<16x1xf32>
    %349 = arith.addf %347, %348 : vector<16x1xf32>
    %350 = math.rsqrt %349 : vector<16x1xf32>
    %351 = vector.broadcast %350 : vector<16x1xf32> to vector<16x32xf32>
    %352 = arith.mulf %342, %351 : vector<16x32xf32>
    %353 = vector.broadcast %335 : vector<1x32xf32> to vector<16x32xf32>
    %354 = arith.mulf %352, %353 : vector<16x32xf32>
    %355 = vector.broadcast %336 : vector<1x32xf32> to vector<16x32xf32>
    %356 = arith.addf %354, %355 : vector<16x32xf32>
    %c352 = arith.constant 352 : index
    %c0_84 = arith.constant 0 : index
    %357 = vector.load %arg1[%c352, %c0_84] : memref<480x128xbf16, #tpu.memory_space<vmem>>, vector<32x64xbf16>
    %358 = arith.truncf %356 : vector<16x32xf32> to vector<16x32xbf16>
    %cst_85 = arith.constant dense<0.000000e+00> : vector<16x64xf32>
    %359 = tpu.matmul %358, %357, %cst_85 {dimension_numbers = #tpu.dot_dimension_numbers<[1], [0], [0], [1], [0, 0, 1, 1], [], []>} : vector<16x32xbf16>, vector<32x64xbf16>, vector<16x64xf32> -> vector<16x64xf32>
    %c96_86 = arith.constant 96 : index
    %c0_87 = arith.constant 0 : index
    %360 = vector.load %arg0[%c96_86, %c0_87] : memref<272x128xf32, #tpu.memory_space<vmem>>, vector<1x64xf32>
    %361 = vector.broadcast %360 : vector<1x64xf32> to vector<16x64xf32>
    %362 = arith.addf %359, %361 : vector<16x64xf32>
    %cst_88 = arith.constant 0.000000e+00 : f32
    %363 = vector.broadcast %cst_88 : f32 to vector<16x64xf32>
    %364 = arith.maximumf %362, %363 : vector<16x64xf32>
    %c384 = arith.constant 384 : index
    %c0_89 = arith.constant 0 : index
    %365 = vector.load %arg1[%c384, %c0_89] : memref<480x128xbf16, #tpu.memory_space<vmem>>, vector<64x32xbf16>
    %366 = arith.truncf %364 : vector<16x64xf32> to vector<16x64xbf16>
    %cst_90 = arith.constant dense<0.000000e+00> : vector<16x32xf32>
    %367 = tpu.matmul %366, %365, %cst_90 {dimension_numbers = #tpu.dot_dimension_numbers<[1], [0], [0], [1], [0, 0, 1, 1], [], []>} : vector<16x64xbf16>, vector<64x32xbf16>, vector<16x32xf32> -> vector<16x32xf32>
    %c104 = arith.constant 104 : index
    %c0_91 = arith.constant 0 : index
    %368 = vector.load %arg0[%c104, %c0_91] : memref<272x128xf32, #tpu.memory_space<vmem>>, vector<1x32xf32>
    %369 = vector.broadcast %368 : vector<1x32xf32> to vector<16x32xf32>
    %370 = arith.addf %367, %369 : vector<16x32xf32>
    %371 = arith.addf %356, %370 : vector<16x32xf32>
    %372 = vector.extract_strided_slice %199 {offsets = [4, 0], sizes = [1, 32], strides = [1, 1]} : vector<6x32xf32> to vector<1x32xf32>
    %373 = vector.extract_strided_slice %199 {offsets = [5, 0], sizes = [1, 32], strides = [1, 1]} : vector<6x32xf32> to vector<1x32xf32>
    %cst_92 = arith.constant dense<0.000000e+00> : vector<16xf32>
    %374 = vector.multi_reduction <add>, %371, %cst_92 [1] : vector<16x32xf32> to vector<16xf32>
    %375 = vector.shape_cast %374 : vector<16xf32> to vector<16x1xf32>
    %cst_93 = arith.constant 3.200000e+01 : f32
    %376 = vector.broadcast %cst_93 : f32 to vector<16x1xf32>
    %377 = arith.divf %375, %376 : vector<16x1xf32>
    %378 = vector.broadcast %377 : vector<16x1xf32> to vector<16x32xf32>
    %379 = arith.subf %371, %378 : vector<16x32xf32>
    %380 = arith.mulf %379, %379 : vector<16x32xf32>
    %cst_94 = arith.constant dense<0.000000e+00> : vector<16xf32>
    %381 = vector.multi_reduction <add>, %380, %cst_94 [1] : vector<16x32xf32> to vector<16xf32>
    %382 = vector.shape_cast %381 : vector<16xf32> to vector<16x1xf32>
    %cst_95 = arith.constant 3.200000e+01 : f32
    %383 = vector.broadcast %cst_95 : f32 to vector<16x1xf32>
    %384 = arith.divf %382, %383 : vector<16x1xf32>
    %cst_96 = arith.constant 9.99999974E-6 : f32
    %385 = vector.broadcast %cst_96 : f32 to vector<16x1xf32>
    %386 = arith.addf %384, %385 : vector<16x1xf32>
    %387 = math.rsqrt %386 : vector<16x1xf32>
    %388 = vector.broadcast %387 : vector<16x1xf32> to vector<16x32xf32>
    %389 = arith.mulf %379, %388 : vector<16x32xf32>
    %390 = vector.broadcast %372 : vector<1x32xf32> to vector<16x32xf32>
    %391 = arith.mulf %389, %390 : vector<16x32xf32>
    %392 = vector.broadcast %373 : vector<1x32xf32> to vector<16x32xf32>
    %393 = arith.addf %391, %392 : vector<16x32xf32>
    %c112 = arith.constant 112 : index
    %c0_97 = arith.constant 0 : index
    %394 = vector.load %arg0[%c112, %c0_97] : memref<272x128xf32, #tpu.memory_space<vmem>>, vector<2x32xf32>
    %395 = vector.extract_strided_slice %394 {offsets = [0, 0], sizes = [1, 32], strides = [1, 1]} : vector<2x32xf32> to vector<1x32xf32>
    %396 = vector.extract_strided_slice %394 {offsets = [1, 0], sizes = [1, 32], strides = [1, 1]} : vector<2x32xf32> to vector<1x32xf32>
    %cst_98 = arith.constant dense<0.000000e+00> : vector<16xf32>
    %397 = vector.multi_reduction <add>, %393, %cst_98 [1] : vector<16x32xf32> to vector<16xf32>
    %398 = vector.shape_cast %397 : vector<16xf32> to vector<16x1xf32>
    %cst_99 = arith.constant 3.200000e+01 : f32
    %399 = vector.broadcast %cst_99 : f32 to vector<16x1xf32>
    %400 = arith.divf %398, %399 : vector<16x1xf32>
    %401 = vector.broadcast %400 : vector<16x1xf32> to vector<16x32xf32>
    %402 = arith.subf %393, %401 : vector<16x32xf32>
    %403 = arith.mulf %402, %402 : vector<16x32xf32>
    %cst_100 = arith.constant dense<0.000000e+00> : vector<16xf32>
    %404 = vector.multi_reduction <add>, %403, %cst_100 [1] : vector<16x32xf32> to vector<16xf32>
    %405 = vector.shape_cast %404 : vector<16xf32> to vector<16x1xf32>
    %cst_101 = arith.constant 3.200000e+01 : f32
    %406 = vector.broadcast %cst_101 : f32 to vector<16x1xf32>
    %407 = arith.divf %405, %406 : vector<16x1xf32>
    %cst_102 = arith.constant 9.99999974E-6 : f32
    %408 = vector.broadcast %cst_102 : f32 to vector<16x1xf32>
    %409 = arith.addf %407, %408 : vector<16x1xf32>
    %410 = math.rsqrt %409 : vector<16x1xf32>
    %411 = vector.broadcast %410 : vector<16x1xf32> to vector<16x32xf32>
    %412 = arith.mulf %402, %411 : vector<16x32xf32>
    %413 = vector.broadcast %395 : vector<1x32xf32> to vector<16x32xf32>
    %414 = arith.mulf %412, %413 : vector<16x32xf32>
    %415 = vector.broadcast %396 : vector<1x32xf32> to vector<16x32xf32>
    %416 = arith.addf %414, %415 : vector<16x32xf32>
    %c448 = arith.constant 448 : index
    %c0_103 = arith.constant 0 : index
    %417 = vector.load %arg1[%c448, %c0_103] : memref<480x128xbf16, #tpu.memory_space<vmem>>, vector<32x128xbf16>
    %418 = arith.truncf %416 : vector<16x32xf32> to vector<16x32xbf16>
    %cst_104 = arith.constant dense<0.000000e+00> : vector<16x128xf32>
    %419 = tpu.matmul %418, %417, %cst_104 {dimension_numbers = #tpu.dot_dimension_numbers<[1], [0], [0], [1], [0, 0, 1, 1], [], []>} : vector<16x32xbf16>, vector<32x128xbf16>, vector<16x128xf32> -> vector<16x128xf32>
    %c120 = arith.constant 120 : index
    %c0_105 = arith.constant 0 : index
    %420 = vector.load %arg0[%c120, %c0_105] : memref<272x128xf32, #tpu.memory_space<vmem>>, vector<1x128xf32>
    %421 = vector.broadcast %420 : vector<1x128xf32> to vector<16x128xf32>
    %422 = arith.addf %419, %421 : vector<16x128xf32>
    %423 = arith.negf %422 : vector<16x128xf32>
    %424 = math.exp %423 : vector<16x128xf32>
    %cst_106 = arith.constant 1.000000e+00 : f32
    %425 = vector.broadcast %cst_106 : f32 to vector<16x128xf32>
    %426 = arith.addf %425, %424 : vector<16x128xf32>
    %427 = arith.divf %425, %426 : vector<16x128xf32>
    %c0_107 = arith.constant 0 : index
    %c0_108 = arith.constant 0 : index
    %428 = vector.load %arg3[%c0_107, %c0_108] : memref<16x128xf32, #tpu.memory_space<vmem>>, vector<16x128xf32>
    tpu.vector_store %arg3[%c0_107, %c0_108], %427 {strides = array<i32>} : memref<16x128xf32, #tpu.memory_space<vmem>>, vector<16x128xf32>,
    return
  }
}

</mosaic_0001>

<llo_original>
// kernel: forward.1
$region0: #{forward.1}
  #allocation0 [shape = 'u32[]', space=smem, size = 0x4, offset = 0x4, fixed_abs, tag = 'smem constant byte address 0x4 - core index']
  #allocation1 [shape = 'u32[72,128]{1,0:T(1,128)}', space=vmem, size = 0x9000, scoped, tag = 'internal scratch']
  %s0 = inlined_call_operand.hbm [shape: f32[272,128], index: 0, kind: input, shape index: {}]
  %s1 = inlined_call_operand.hbm [shape: bf16[480,128], index: 1, kind: input, shape index: {}]
  %s2 = inlined_call_operand.vmem [shape: f32[18,32], index: 2, kind: input, shape index: {}]
  %s3 = inlined_call_operand.vmem [shape: f32[16,128], index: 3, kind: output, shape index: {}]
  %s4 = sld [smem:[#allocation0]]
  $region30: #{forward.1} parent=0
    _
  %s6 = ssub.s32 1, %s4
  %s7 = scalar_select 0, %s6, %s4
  $region1: #{forward.1} parent=0
    #allocation2 [shape = 'u8[139264]{0}', space=vmem, size = 0x22000, scoped, tag = 'input window, operand 0, single buffered']
    #allocation3 [shape = 's32[1]{0}', space=sflag, size = 0x4, scoped, tag = 'scoped memory for forward.1']
    #allocation4 [shape = 'u8[122880]{0}', space=vmem, size = 0x1e000, scoped, tag = 'input window, operand 1, single buffered']
    #allocation5 [shape = 's32[1]{0}', space=sflag, size = 0x4, scoped, tag = 'scoped memory for forward.1']
    %8 = vsyncpa [#allocation3], 0
    %9 = vsyncpa [#allocation5], 0
    // Predicated region
    $region2: #{forward.1} parent=1 // pred_check
      _
    $region3: #{forward.1} parent=1 // pred_check_branch
      %11 = sbr.rel (0) target = $region5
    $region4: #{forward.1} parent=1 // pred_region
      %13 = vsyncadd [#allocation3], 0
      %s14 = sshll.u32 %s0, 4
      %s15 = int_to_ptr.hbm [resolvable:$true] %s14
      %s16 = sshll.u32 [#allocation2], 4
      %s17 = int_to_ptr.vmem [resolvable:$true] %s16
      %22 = dma.hbm_to_vmem [thread:$0]  %s15, 4352, %s17, [#allocation3], 128, 128, 8
    $region5: #{forward.1} parent=1 // pred_fallthru
      _
    // Predicated region
    $region6: #{forward.1} parent=1 // pred_check
      _
    $region7: #{forward.1} parent=1 // pred_check_branch
      %24 = sbr.rel (0) target = $region9
    $region8: #{forward.1} parent=1 // pred_region
      %26 = vsyncadd [#allocation5], 0
      %s27 = sshll.u32 %s1, 4
      %s28 = int_to_ptr.hbm [resolvable:$true] %s27
      %s29 = sshll.u32 [#allocation4], 4
      %s30 = int_to_ptr.vmem [resolvable:$true] %s29
      %35 = dma.hbm_to_vmem [thread:$0]  %s28, 3840, %s30, [#allocation5], 64, 64, 4
    $region9: #{forward.1} parent=1 // pred_fallthru
      _
    // Predicated region
    $region10: #{forward.1} parent=1 // pred_check
      _
    $region11: #{forward.1} parent=1 // pred_check_branch
      %37 = sbr.rel (0) target = $region13
    $region12: #{forward.1} parent=1 // pred_region
      _
    $region13: #{forward.1} parent=1 // pred_fallthru
      _
    // Predicated region
    $region14: #{forward.1} parent=1 // pred_check
      _
    $region15: #{forward.1} parent=1 // pred_check_branch
      %39 = sbr.rel (0) target = $region17
    $region16: #{forward.1} parent=1 // pred_region
      %41 = dma.done [#allocation3], 4352
    $region17: #{forward.1} parent=1 // pred_fallthru
      _
    // Predicated region
    $region18: #{forward.1} parent=1 // pred_check
      _
    $region19: #{forward.1} parent=1 // pred_check_branch
      %43 = sbr.rel (0) target = $region21
    $region20: #{forward.1} parent=1 // pred_region
      %45 = dma.done [#allocation5], 3840
    $region21: #{forward.1} parent=1 // pred_fallthru
      _
    %v47 = vld [vmem:[%s2] sm:$0xff]
    %v48 = vld [vmem:[%s2 + $0x8] sm:$0xff]
    %v49 = vld [vmem:[%s2 + $0x10] sm:$0x3]
    %v50 = vld [vmem:[#allocation2 + $0x80] sm:$0xff]
    %v51 = vld [vmem:[#allocation2 + $0x88] sm:$0xff]
    %v52 = vld [vmem:[#allocation2 + $0x90] sm:$0xff]
    %v53 = vld [vmem:[#allocation2 + $0x98] sm:$0xff]
    %v54 = vld [vmem:[#allocation2 + $0xa0] sm:$0xff]
    %v55 = vld [vmem:[#allocation2 + $0xa8] sm:$0xff]
    %v56 = vld [vmem:[#allocation2 + $0xb0] sm:$0xff]
    %v57 = vld [vmem:[#allocation2 + $0xb8] sm:$0xff]
    %v58 = vld [vmem:[#allocation2 + $0xc0] sm:$0xff]
    %v59 = vld [vmem:[#allocation2 + $0xc8] sm:$0xff]
    %v60 = vld [vmem:[#allocation2 + $0xd0] sm:$0xff]
    %v61 = vld [vmem:[#allocation2 + $0xd8] sm:$0xff]
    %v62 = vld [vmem:[#allocation2 + $0xe0] sm:$0xff]
    %v63 = vld [vmem:[#allocation2 + $0xe8] sm:$0xff]
    %v64 = vld [vmem:[#allocation2 + $0xf0] sm:$0xff]
    %v65 = vld [vmem:[#allocation2 + $0xf8] sm:$0xff]
    %v66 = vld [vmem:[#allocation2 + $0x100] sm:$0xff]
    %v67 = vld [vmem:[#allocation2 + $0x108] sm:$0xff]
    %v68 = vld [vmem:[#allocation2 + $0x20] sm:$0x3f]
    %v69 = vld [vmem:[#allocation4] sm:$0xf]
    %v70 = vld [vmem:[#allocation4 + $0x4] sm:$0xf]
    %v71 = vld [vmem:[#allocation4 + $0x8] sm:$0xf]
    %v72 = vld [vmem:[#allocation4 + $0xc] sm:$0xf]
    %v73 = vpack.c.bf16 %v51, %v50
    %v74 = vld [vmem:[#allocation2] sm:$0x1]
    %v75 = vperm.slane %v74, 0
    %v80 = vunpack.c.l.b16 %v69
    %v81 = vunpack.c.l.b16 %v70
    %v82 = vunpack.c.l.b16 %v71
    %v83 = vunpack.c.l.b16 %v72
    %v84 = vpack.c.b16 %v81, %v80
    %v85 = vpack.c.b16 %v83, %v82
    %vm88 = vcmask 261120
    %v90 = vsel %vm88, %v73, 0
    %92 = vmatpush.bf16.msra.mxu0 0
    %93 = vmatpush.bf16.msra.mxu0 0
    %94 = vmatpush.bf16.msra.mxu0 0
    %95 = vmatpush.bf16.msra.mxu0 0
    %96 = vmatpush.bf16.msra.mxu0 0
    %97 = vmatpush.bf16.msra.mxu0 0
    %98 = vmatpush.bf16.msra.mxu0 %v85
    %99 = vmatpush.bf16.msra.mxu0 %v84
    %100 = vmatmul.bf16.gmra.mxu0 %v90
    %v101 = vpop.f32.mrf.mxu0
    %v102 = vadd.f32 %v75, %v101
    %v103 = vpop.f32.mrf.mxu0
    %v104 = vadd.f32 %v75, %v103
    %105 = vdwg.mxu0
    %108 = vrot.lane.b32.xlu0 %v102, 120
    %v109 = vpop.permute.xlu0 %108
    %110 = vrot.lane.b32.xlu0 %v104, 120
    %v111 = vpop.permute.xlu0 %110
    %114 = vrot.lane.b32.xlu0 %v102, 112
    %v115 = vpop.permute.xlu0 %114
    %116 = vrot.lane.b32.xlu0 %v104, 112
    %v117 = vpop.permute.xlu0 %116
    %120 = vrot.lane.b32.xlu0 %v102, 104
    %v121 = vpop.permute.xlu0 %120
    %122 = vrot.lane.b32.xlu0 %v104, 104
    %v123 = vpop.permute.xlu0 %122
    %v126 = vld [vmem:[#allocation2 + $0x10] sm:$0x1]
    %v127 = vpack.c.bf16 %v104, %v102
    %v128 = vpack.c.bf16 %v111, %v109
    %v129 = vpack.c.bf16 %v117, %v115
    %v130 = vpack.c.bf16 %v123, %v121
    %135 = vrot.lane.b32.xlu0 %v127, 96
    %v136 = vpop.permute.xlu0 %135
    %137 = vrot.lane.b32.xlu0 %v128, 96
    %v138 = vpop.permute.xlu0 %137
    %139 = vrot.lane.b32.xlu0 %v129, 96
    %v140 = vpop.permute.xlu0 %139
    %141 = vrot.lane.b32.xlu0 %v130, 96
    %v142 = vpop.permute.xlu0 %141
    %vm143 = vcmask 64512
    %v145 = vsel %vm143, %v127, 0
    %v148 = vsel %vm143, %v128, 0
    %v151 = vsel %vm143, %v129, 0
    %v154 = vsel %vm143, %v130, 0
    %v157 = vsel %vm143, %v136, 0
    %v160 = vsel %vm143, %v138, 0
    %v163 = vsel %vm143, %v140, 0
    %v166 = vsel %vm143, %v142, 0
    %168 = vmatpush.bf16.xpose.msra.mxu0 0
    %169 = vmatpush.bf16.xpose.msra.mxu0 0
    %170 = vmatpush.bf16.xpose.msra.mxu0 0
    %171 = vmatpush.bf16.xpose.msra.mxu0 0
    %172 = vmatpush.bf16.xpose.msra.mxu0 %v166
    %173 = vmatpush.bf16.xpose.msra.mxu0 %v163
    %174 = vmatpush.bf16.xpose.msra.mxu0 %v160
    %175 = vmatpush.bf16.xpose.msra.mxu0 %v157
    %176 = vmatmul.bf16.gmra.mxu0 %v145
    %v177 = vpop.f32.mrf.mxu0
    %v178 = vadd.f32 %v52, %v177
    %v179 = vpop.f32.mrf.mxu0
    %v180 = vadd.f32 %v53, %v179
    %181 = vmatmul.bf16.gmra.mxu0 %v148
    %v182 = vpop.f32.mrf.mxu0
    %v183 = vadd.f32 %v54, %v182
    %v184 = vpop.f32.mrf.mxu0
    %v185 = vadd.f32 %v55, %v184
    %186 = vmatmul.bf16.gmra.mxu0 %v151
    %v187 = vpop.f32.mrf.mxu0
    %v188 = vadd.f32 %v56, %v187
    %v189 = vpop.f32.mrf.mxu0
    %v190 = vadd.f32 %v57, %v189
    %191 = vmatmul.bf16.gmra.mxu0 %v154
    %v192 = vpop.f32.mrf.mxu0
    %v193 = vadd.f32 %v58, %v192
    %v194 = vpop.f32.mrf.mxu0
    %v195 = vadd.f32 %v59, %v194
    %196 = vdwg.mxu0
    %vm197 = vcmask 523264
    %v198 = vsel %vm197, %v178, -inf
    %199 = vmax.xlane.f32.xlu0 %v198
    %v200 = vpop.xlane.xlu0 %199
    %v201 = vsel %vm197, %v180, -inf
    %202 = vmax.xlane.f32.xlu0 %v201
    %v203 = vpop.xlane.xlu0 %202
    %v204 = vsel %vm197, %v183, -inf
    %205 = vmax.xlane.f32.xlu0 %v204
    %v206 = vpop.xlane.xlu0 %205
    %v207 = vsel %vm197, %v185, -inf
    %208 = vmax.xlane.f32.xlu0 %v207
    %v209 = vpop.xlane.xlu0 %208
    %v210 = vsel %vm197, %v188, -inf
    %211 = vmax.xlane.f32.xlu0 %v210
    %v212 = vpop.xlane.xlu0 %211
    %v213 = vsel %vm197, %v190, -inf
    %214 = vmax.xlane.f32.xlu0 %v213
    %v215 = vpop.xlane.xlu0 %214
    %v216 = vsel %vm197, %v193, -inf
    %217 = vmax.xlane.f32.xlu0 %v216
    %v218 = vpop.xlane.xlu0 %217
    %v219 = vsel %vm197, %v195, -inf
    %220 = vmax.xlane.f32.xlu0 %v219
    %v221 = vpop.xlane.xlu0 %220
    %v222 = vsub.f32 %v178, %v200
    %v223 = vsub.f32 %v180, %v203
    %v224 = vsub.f32 %v183, %v206
    %v225 = vsub.f32 %v185, %v209
    %v226 = vsub.f32 %v188, %v212
    %v227 = vsub.f32 %v190, %v215
    %v228 = vsub.f32 %v193, %v218
    %v229 = vsub.f32 %v195, %v221
    %v230 = vmul.f32 %v222, 1.442695
    %v231 = vpow.pop %v230
    %v232 = vmul.f32 %v223, 1.442695
    %v233 = vpow.pop %v232
    %v234 = vmul.f32 %v224, 1.442695
    %v235 = vpow.pop %v234
    %v236 = vmul.f32 %v225, 1.442695
    %v237 = vpow.pop %v236
    %v238 = vmul.f32 %v226, 1.442695
    %v239 = vpow.pop %v238
    %v240 = vmul.f32 %v227, 1.442695
    %v241 = vpow.pop %v240
    %v242 = vmul.f32 %v228, 1.442695
    %v243 = vpow.pop %v242
    %v244 = vmul.f32 %v229, 1.442695
    %v245 = vpow.pop %v244
    %v246 = vsel %vm197, %v231, 0.0
    %247 = vadd.xlane.f32.xlu0 %v246
    %v248 = vpop.xlane.xlu0 %247
    %v249 = vsel %vm197, %v233, 0.0
    %250 = vadd.xlane.f32.xlu0 %v249
    %v251 = vpop.xlane.xlu0 %250
    %v252 = vsel %vm197, %v235, 0.0
    %253 = vadd.xlane.f32.xlu0 %v252
    %v254 = vpop.xlane.xlu0 %253
    %v255 = vsel %vm197, %v237, 0.0
    %256 = vadd.xlane.f32.xlu0 %v255
    %v257 = vpop.xlane.xlu0 %256
    %v258 = vsel %vm197, %v239, 0.0
    %259 = vadd.xlane.f32.xlu0 %v258
    %v260 = vpop.xlane.xlu0 %259
    %v261 = vsel %vm197, %v241, 0.0
    %262 = vadd.xlane.f32.xlu0 %v261
    %v263 = vpop.xlane.xlu0 %262
    %v264 = vsel %vm197, %v243, 0.0
    %265 = vadd.xlane.f32.xlu0 %v264
    %v266 = vpop.xlane.xlu0 %265
    %v267 = vsel %vm197, %v245, 0.0
    %268 = vadd.xlane.f32.xlu0 %v267
    %v269 = vpop.xlane.xlu0 %268
    %v270 = vrcp.pop %v248
    %v271 = vrcp.pop %v251
    %v272 = vrcp.pop %v254
    %v273 = vrcp.pop %v257
    %v274 = vrcp.pop %v260
    %v275 = vrcp.pop %v263
    %v276 = vrcp.pop %v266
    %v277 = vrcp.pop %v269
    %v278 = vmul.f32 %v231, %v270
    %v279 = vmul.f32 %v233, %v271
    %v280 = vmul.f32 %v235, %v272
    %v281 = vmul.f32 %v237, %v273
    %v282 = vmul.f32 %v239, %v274
    %v283 = vmul.f32 %v241, %v275
    %v284 = vmul.f32 %v243, %v276
    %v285 = vmul.f32 %v245, %v277
    %v286 = vpack.c.bf16 %v279, %v278
    %v287 = vpack.c.bf16 %v281, %v280
    %v288 = vpack.c.bf16 %v283, %v282
    %v289 = vpack.c.bf16 %v285, %v284
    %290 = vrot.lane.b32.xlu0 %v127, 64
    %v291 = vpop.permute.xlu0 %290
    %292 = vrot.lane.b32.xlu0 %v128, 64
    %v293 = vpop.permute.xlu0 %292
    %294 = vrot.lane.b32.xlu0 %v129, 64
    %v295 = vpop.permute.xlu0 %294
    %296 = vrot.lane.b32.xlu0 %v130, 64
    %v297 = vpop.permute.xlu0 %296
    %v303 = vsel %vm197, %v286, 0
    %v306 = vsel %vm197, %v287, 0
    %v309 = vsel %vm197, %v288, 0
    %v312 = vsel %vm197, %v289, 0
    %314 = vmatpush.bf16.msra.mxu0 0
    %315 = vmatpush.bf16.msra.mxu0 0
    %316 = vmatpush.bf16.msra.mxu0 0
    %317 = vmatpush.bf16.msra.mxu0 0
    %318 = vmatpush.bf16.msra.mxu0 %v297
    %319 = vmatpush.bf16.msra.mxu0 %v295
    %320 = vmatpush.bf16.msra.mxu0 %v293
    %321 = vmatpush.bf16.msra.mxu0 %v291
    %322 = vmatmul.bf16.gmra.mxu0 %v303
    %v323 = vpop.f32.mrf.mxu0
    %v324 = vadd.f32 0.0, %v323
    %v325 = vpop.f32.mrf.mxu0
    %v326 = vadd.f32 0.0, %v325
    %327 = vmatmul.bf16.gmra.mxu0 %v306
    %v328 = vpop.f32.mrf.mxu0
    %v329 = vadd.f32 0.0, %v328
    %v330 = vpop.f32.mrf.mxu0
    %v331 = vadd.f32 0.0, %v330
    %332 = vmatmul.bf16.gmra.mxu0 %v309
    %v333 = vpop.f32.mrf.mxu0
    %v334 = vadd.f32 0.0, %v333
    %v335 = vpop.f32.mrf.mxu0
    %v336 = vadd.f32 0.0, %v335
    %337 = vmatmul.bf16.gmra.mxu0 %v312
    %v338 = vpop.f32.mrf.mxu0
    %v339 = vadd.f32 0.0, %v338
    %v340 = vpop.f32.mrf.mxu0
    %v341 = vadd.f32 0.0, %v340
    %342 = vdwg.mxu0
    %345 = vrot.lane.b32.xlu0 %v329, 8
    %v346 = vpop.permute.xlu0 %345
    %347 = vrot.lane.b32.xlu0 %v331, 8
    %v348 = vpop.permute.xlu0 %347
    %353 = vrot.lane.b32.xlu0 %v334, 16
    %v354 = vpop.permute.xlu0 %353
    %355 = vrot.lane.b32.xlu0 %v336, 16
    %v356 = vpop.permute.xlu0 %355
    %361 = vrot.lane.b32.xlu0 %v339, 24
    %v362 = vpop.permute.xlu0 %361
    %363 = vrot.lane.b32.xlu0 %v341, 24
    %v364 = vpop.permute.xlu0 %363
    %v367 = vsel %vm143, %v324, %v346
    %v368 = vsel %vm143, %v326, %v348
    %vm369 = vcmask 130048
    %v370 = vsel %vm369, %v367, %v354
    %v371 = vsel %vm369, %v368, %v356
    %vm372 = vcmask 195584
    %v373 = vsel %vm372, %v370, %v362
    %v374 = vsel %vm372, %v371, %v364
    %v375 = vld [vmem:[#allocation4 + $0x20] sm:$0xf]
    %v376 = vld [vmem:[#allocation4 + $0x24] sm:$0xf]
    %v377 = vld [vmem:[#allocation4 + $0x28] sm:$0xf]
    %v378 = vld [vmem:[#allocation4 + $0x2c] sm:$0xf]
    %v379 = vpack.c.bf16 %v374, %v373
    %v380 = vperm.slane %v126, 0
    %v385 = vunpack.c.l.b16 %v375
    %v386 = vunpack.c.l.b16 %v376
    %v387 = vunpack.c.l.b16 %v377
    %v388 = vunpack.c.l.b16 %v378
    %v389 = vpack.c.b16 %v386, %v385
    %v390 = vpack.c.b16 %v388, %v387
    %v394 = vsel %vm88, %v379, 0
    %396 = vmatpush.bf16.msra.mxu0 0
    %397 = vmatpush.bf16.msra.mxu0 0
    %398 = vmatpush.bf16.msra.mxu0 0
    %399 = vmatpush.bf16.msra.mxu0 0
    %400 = vmatpush.bf16.msra.mxu0 0
    %401 = vmatpush.bf16.msra.mxu0 0
    %402 = vmatpush.bf16.msra.mxu0 %v390
    %403 = vmatpush.bf16.msra.mxu0 %v389
    %404 = vmatmul.bf16.gmra.mxu0 %v394
    %v405 = vpop.f32.mrf.mxu0
    %v406 = vadd.f32 %v380, %v405
    %v407 = vpop.f32.mrf.mxu0
    %v408 = vadd.f32 %v380, %v407
    %409 = vdwg.mxu0
    %v410 = vadd.f32 %v50, %v406
    %v411 = vadd.f32 %v51, %v408
    %v412 = vsel %vm88, %v410, 0.0
    %413 = vadd.xlane.f32.xlu0 %v412
    %v414 = vpop.xlane.xlu0 %413
    %v415 = vsel %vm88, %v411, 0.0
    %416 = vadd.xlane.f32.xlu0 %v415
    %v417 = vpop.xlane.xlu0 %416
    %v418 = vrcp.pop 32.0
    %v419 = vmul.f32 32.0, %v418
    %v420 = vsub.f32 1.0, %v419
    %v421 = vmul.f32 %v418, %v420
    %v422 = vadd.f32 %v418, %v421
    %vm423 = vweird.f32 %v418
    %v424 = vsel %vm423, %v418, %v422
    %v425 = vmul.f32 %v414, %v424
    %v426 = vmul.f32 %v417, %v424
    %v427 = vsub.f32 %v410, %v425
    %v428 = vsub.f32 %v411, %v426
    %v429 = vmul.f32 %v427, %v427
    %v430 = vmul.f32 %v428, %v428
    %v431 = vsel %vm88, %v429, 0.0
    %432 = vadd.xlane.f32.xlu0 %v431
    %v433 = vpop.xlane.xlu0 %432
    %v434 = vsel %vm88, %v430, 0.0
    %435 = vadd.xlane.f32.xlu0 %v434
    %v436 = vpop.xlane.xlu0 %435
    %v437 = vmul.f32 %v433, %v424
    %v438 = vmul.f32 %v436, %v424
    %v439 = vadd.f32 %v437, 1e-05
    %v440 = vadd.f32 %v438, 1e-05
    %v441 = vrsqrt.pop %v439
    %v442 = vmul.f32 %v441, %v439
    %v443 = vmul.f32 %v442, %v441
    %v444 = vmul.f32 0.5, %v443
    %v445 = vsub.f32 1.5, %v444
    %v446 = vmul.f32 %v441, %v445
    %vm447 = vweird.f32 %v439
    %vm448 = vweird.f32 %v441
    %vm449 = vmor %vm447, %vm448
    %v450 = vsel %vm449, %v441, %v446
    %v451 = vrsqrt.pop %v440
    %v452 = vmul.f32 %v451, %v440
    %v453 = vmul.f32 %v452, %v451
    %v454 = vmul.f32 0.5, %v453
    %v455 = vsub.f32 1.5, %v454
    %v456 = vmul.f32 %v451, %v455
    %vm457 = vweird.f32 %v440
    %vm458 = vweird.f32 %v451
    %vm459 = vmor %vm457, %vm458
    %v460 = vsel %vm459, %v451, %v456
    %v461 = vmul.f32 %v427, %v450
    %v462 = vmul.f32 %v428, %v460
    %v463 = vperm.slane %v68, 0
    %v464 = vmul.f32 %v461, %v463
    %v465 = vmul.f32 %v462, %v463
    %v466 = vperm.slane %v68, 1
    %v467 = vadd.f32 %v464, %v466
    %v468 = vadd.f32 %v465, %v466
    %v469 = vld [vmem:[#allocation4 + $0x10] sm:$0xf]
    %v470 = vld [vmem:[#allocation4 + $0x14] sm:$0xf]
    %v471 = vld [vmem:[#allocation4 + $0x18] sm:$0xf]
    %v472 = vld [vmem:[#allocation4 + $0x1c] sm:$0xf]
    %v473 = vld [vmem:[#allocation2 + $0x8] sm:$0x1]
    %v474 = vpack.c.bf16 %v468, %v467
    %v475 = vperm.slane %v473, 0
    %v480 = vunpack.c.l.b16 %v469
    %v481 = vunpack.c.l.b16 %v470
    %v482 = vunpack.c.l.b16 %v471
    %v483 = vunpack.c.l.b16 %v472
    %v484 = vpack.c.b16 %v481, %v480
    %v485 = vpack.c.b16 %v483, %v482
    %v489 = vsel %vm88, %v474, 0
    %491 = vmatpush.bf16.msra.mxu0 0
    %492 = vmatpush.bf16.msra.mxu0 0
    %493 = vmatpush.bf16.msra.mxu0 0
    %494 = vmatpush.bf16.msra.mxu0 0
    %495 = vmatpush.bf16.msra.mxu0 0
    %496 = vmatpush.bf16.msra.mxu0 0
    %497 = vmatpush.bf16.msra.mxu0 %v485
    %498 = vmatpush.bf16.msra.mxu0 %v484
    %499 = vmatmul.bf16.gmra.mxu0 %v489
    %v500 = vpop.f32.mrf.mxu0
    %v501 = vadd.f32 %v475, %v500
    %v502 = vpop.f32.mrf.mxu0
    %v503 = vadd.f32 %v475, %v502
    %504 = vdwg.mxu0
    %v505 = vpack.c.bf16 %v48, %v47
    %v506 = vpack.c.bf16 %v49, %v49
    %507 = vrot.lane.b32.xlu0 %v484, 96
    %v508 = vpop.permute.xlu0 %507
    %509 = vrot.lane.b32.xlu0 %v485, 96
    %v510 = vpop.permute.xlu0 %509
    %514 = vrot.lane.b32.xlu0 %v475, 96
    %v515 = vpop.permute.xlu0 %514
    %v518 = vsel %vm88, %v505, 0
    %v521 = vsel %vm88, %v506, 0
    %523 = vmatpush.bf16.msra.mxu0 0
    %524 = vmatpush.bf16.msra.mxu0 0
    %525 = vmatpush.bf16.msra.mxu0 0
    %526 = vmatpush.bf16.msra.mxu0 0
    %527 = vmatpush.bf16.msra.mxu0 0
    %528 = vmatpush.bf16.msra.mxu0 0
    %529 = vmatpush.bf16.msra.mxu0 %v510
    %530 = vmatpush.bf16.msra.mxu0 %v508
    %531 = vmatmul.bf16.gmra.mxu0 %v518
    %v532 = vpop.f32.mrf.mxu0
    %v533 = vadd.f32 %v515, %v532
    %v534 = vpop.f32.mrf.mxu0
    %v535 = vadd.f32 %v515, %v534
    %536 = vmatmul.bf16.gmra.mxu0 %v521
    %v537 = vpop.f32.mrf.mxu0
    %v538 = vadd.f32 %v515, %v537
    %v539 = vpop.f32.mrf.mxu0
    %540 = vdwg.mxu0
    %543 = vrot.lane.b32.xlu0 %v501, 120
    %v544 = vpop.permute.xlu0 %543
    %545 = vrot.lane.b32.xlu0 %v503, 120
    %v546 = vpop.permute.xlu0 %545
    %549 = vrot.lane.b32.xlu0 %v501, 112
    %v550 = vpop.permute.xlu0 %549
    %551 = vrot.lane.b32.xlu0 %v503, 112
    %v552 = vpop.permute.xlu0 %551
    %555 = vrot.lane.b32.xlu0 %v501, 104
    %v556 = vpop.permute.xlu0 %555
    %557 = vrot.lane.b32.xlu0 %v503, 104
    %v558 = vpop.permute.xlu0 %557
    %vm564 = vcmask 1041408
    %v565 = vrot.slane %v533, 6
    %v566 = vrot.slane %v535, 6
    %v567 = vsel %vm564, %v565, %v566
    %v568 = vrot.slane %v538, 6
    %v569 = vsel %vm564, %v566, %v568
    %570 = vrot.lane.b32.xlu0 %v565, 120
    %v571 = vpop.permute.xlu0 %570
    %572 = vrot.lane.b32.xlu0 %v567, 120
    %v573 = vpop.permute.xlu0 %572
    %574 = vrot.lane.b32.xlu0 %v569, 120
    %v575 = vpop.permute.xlu0 %574
    %vm579 = vcmask 1043456
    %v580 = vrot.slane %v533, 4
    %v581 = vrot.slane %v535, 4
    %v582 = vsel %vm579, %v580, %v581
    %v583 = vrot.slane %v538, 4
    %v584 = vsel %vm579, %v581, %v583
    %585 = vrot.lane.b32.xlu0 %v580, 112
    %v586 = vpop.permute.xlu0 %585
    %587 = vrot.lane.b32.xlu0 %v582, 112
    %v588 = vpop.permute.xlu0 %587
    %589 = vrot.lane.b32.xlu0 %v584, 112
    %v590 = vpop.permute.xlu0 %589
    %vm594 = vcmask 1045504
    %v595 = vrot.slane %v533, 2
    %v596 = vrot.slane %v535, 2
    %v597 = vsel %vm594, %v595, %v596
    %v598 = vrot.slane %v538, 2
    %v599 = vsel %vm594, %v596, %v598
    %600 = vrot.lane.b32.xlu0 %v595, 104
    %v601 = vpop.permute.xlu0 %600
    %602 = vrot.lane.b32.xlu0 %v597, 104
    %v603 = vpop.permute.xlu0 %602
    %604 = vrot.lane.b32.xlu0 %v599, 104
    %v605 = vpop.permute.xlu0 %604
    %v609 = vsel %vm564, %v538, %v571
    %v610 = vsel %vm579, %v575, %v586
    %v611 = vsel %vm594, %v590, %v601
    %v612 = vld [vmem:[#allocation2 + $0x18] sm:$0x1]
    %v613 = vpack.c.bf16 %v503, %v501
    %v614 = vpack.c.bf16 %v546, %v544
    %v615 = vpack.c.bf16 %v552, %v550
    %v616 = vpack.c.bf16 %v558, %v556
    %v617 = vpack.c.bf16 %v535, %v533
    %v618 = vpack.c.bf16 %v573, %v609
    %v619 = vpack.c.bf16 %v588, %v610
    %v620 = vpack.c.bf16 %v603, %v611
    %v621 = vpack.c.bf16 %v605, %v605
    %v623 = vsel %vm143, %v613, 0
    %v626 = vsel %vm143, %v614, 0
    %v629 = vsel %vm143, %v615, 0
    %v632 = vsel %vm143, %v616, 0
    %v635 = vsel %vm143, %v617, 0
    %v638 = vsel %vm143, %v618, 0
    %v641 = vsel %vm143, %v619, 0
    %v644 = vsel %vm143, %v620, 0
    %v647 = vsel %vm143, %v621, 0
    %649 = vmatpush.bf16.xpose.msra.mxu0 0
    %650 = vmatpush.bf16.xpose.msra.mxu0 0
    %651 = vmatpush.bf16.xpose.msra.mxu0 0
    %652 = vmatpush.bf16.xpose.msra.mxu0 %v647
    %653 = vmatpush.bf16.xpose.msra.mxu0 %v644
    %654 = vmatpush.bf16.xpose.msra.mxu0 %v641
    %655 = vmatpush.bf16.xpose.msra.mxu0 %v638
    %656 = vmatpush.bf16.xpose.msra.mxu0 %v635
    %657 = vmatmul.bf16.gmra.mxu0 %v623
    %v658 = vpop.f32.mrf.mxu0
    %v659 = vadd.f32 %v60, %v658
    %v660 = vpop.f32.mrf.mxu0
    %v661 = vadd.f32 %v61, %v660
    %662 = vmatmul.bf16.gmra.mxu0 %v626
    %v663 = vpop.f32.mrf.mxu0
    %v664 = vadd.f32 %v62, %v663
    %v665 = vpop.f32.mrf.mxu0
    %v666 = vadd.f32 %v63, %v665
    %667 = vmatmul.bf16.gmra.mxu0 %v629
    %v668 = vpop.f32.mrf.mxu0
    %v669 = vadd.f32 %v64, %v668
    %v670 = vpop.f32.mrf.mxu0
    %v671 = vadd.f32 %v65, %v670
    %672 = vmatmul.bf16.gmra.mxu0 %v632
    %v673 = vpop.f32.mrf.mxu0
    %v674 = vadd.f32 %v66, %v673
    %v675 = vpop.f32.mrf.mxu0
    %v676 = vadd.f32 %v67, %v675
    %677 = vdwg.mxu0
    %vm678 = vcmask 588800
    %v679 = vsel %vm678, %v659, -inf
    %680 = vmax.xlane.f32.xlu0 %v679
    %v681 = vpop.xlane.xlu0 %680
    %v682 = vsel %vm678, %v661, -inf
    %683 = vmax.xlane.f32.xlu0 %v682
    %v684 = vpop.xlane.xlu0 %683
    %v685 = vsel %vm678, %v664, -inf
    %686 = vmax.xlane.f32.xlu0 %v685
    %v687 = vpop.xlane.xlu0 %686
    %v688 = vsel %vm678, %v666, -inf
    %689 = vmax.xlane.f32.xlu0 %v688
    %v690 = vpop.xlane.xlu0 %689
    %v691 = vsel %vm678, %v669, -inf
    %692 = vmax.xlane.f32.xlu0 %v691
    %v693 = vpop.xlane.xlu0 %692
    %v694 = vsel %vm678, %v671, -inf
    %695 = vmax.xlane.f32.xlu0 %v694
    %v696 = vpop.xlane.xlu0 %695
    %v697 = vsel %vm678, %v674, -inf
    %698 = vmax.xlane.f32.xlu0 %v697
    %v699 = vpop.xlane.xlu0 %698
    %v700 = vsel %vm678, %v676, -inf
    %701 = vmax.xlane.f32.xlu0 %v700
    %v702 = vpop.xlane.xlu0 %701
    %v703 = vsub.f32 %v659, %v681
    %v704 = vsub.f32 %v661, %v684
    %v705 = vsub.f32 %v664, %v687
    %v706 = vsub.f32 %v666, %v690
    %v707 = vsub.f32 %v669, %v693
    %v708 = vsub.f32 %v671, %v696
    %v709 = vsub.f32 %v674, %v699
    %v710 = vsub.f32 %v676, %v702
    %v711 = vmul.f32 %v703, 1.442695
    %v712 = vpow.pop %v711
    %v713 = vmul.f32 %v704, 1.442695
    %v714 = vpow.pop %v713
    %v715 = vmul.f32 %v705, 1.442695
    %v716 = vpow.pop %v715
    %v717 = vmul.f32 %v706, 1.442695
    %v718 = vpow.pop %v717
    %v719 = vmul.f32 %v707, 1.442695
    %v720 = vpow.pop %v719
    %v721 = vmul.f32 %v708, 1.442695
    %v722 = vpow.pop %v721
    %v723 = vmul.f32 %v709, 1.442695
    %v724 = vpow.pop %v723
    %v725 = vmul.f32 %v710, 1.442695
    %v726 = vpow.pop %v725
    %v727 = vsel %vm678, %v712, 0.0
    %728 = vadd.xlane.f32.xlu0 %v727
    %v729 = vpop.xlane.xlu0 %728
    %v730 = vsel %vm678, %v714, 0.0
    %731 = vadd.xlane.f32.xlu0 %v730
    %v732 = vpop.xlane.xlu0 %731
    %v733 = vsel %vm678, %v716, 0.0
    %734 = vadd.xlane.f32.xlu0 %v733
    %v735 = vpop.xlane.xlu0 %734
    %v736 = vsel %vm678, %v718, 0.0
    %737 = vadd.xlane.f32.xlu0 %v736
    %v738 = vpop.xlane.xlu0 %737
    %v739 = vsel %vm678, %v720, 0.0
    %740 = vadd.xlane.f32.xlu0 %v739
    %v741 = vpop.xlane.xlu0 %740
    %v742 = vsel %vm678, %v722, 0.0
    %743 = vadd.xlane.f32.xlu0 %v742
    %v744 = vpop.xlane.xlu0 %743
    %v745 = vsel %vm678, %v724, 0.0
    %746 = vadd.xlane.f32.xlu0 %v745
    %v747 = vpop.xlane.xlu0 %746
    %v748 = vsel %vm678, %v726, 0.0
    %749 = vadd.xlane.f32.xlu0 %v748
    %v750 = vpop.xlane.xlu0 %749
    %v751 = vrcp.pop %v729
    %v752 = vrcp.pop %v732
    %v753 = vrcp.pop %v735
    %v754 = vrcp.pop %v738
    %v755 = vrcp.pop %v741
    %v756 = vrcp.pop %v744
    %v757 = vrcp.pop %v747
    %v758 = vrcp.pop %v750
    %v759 = vmul.f32 %v712, %v751
    %v760 = vmul.f32 %v714, %v752
    %v761 = vmul.f32 %v716, %v753
    %v762 = vmul.f32 %v718, %v754
    %v763 = vmul.f32 %v720, %v755
    %v764 = vmul.f32 %v722, %v756
    %v765 = vmul.f32 %v724, %v757
    %v766 = vmul.f32 %v726, %v758
    %v767 = vpack.c.bf16 %v760, %v759
    %v768 = vpack.c.bf16 %v762, %v761
    %v769 = vpack.c.bf16 %v764, %v763
    %v770 = vpack.c.bf16 %v766, %v765
    %776 = vrot.lane.b32.xlu0 %v617, 96
    %v777 = vpop.permute.xlu0 %776
    %778 = vrot.lane.b32.xlu0 %v618, 96
    %v779 = vpop.permute.xlu0 %778
    %780 = vrot.lane.b32.xlu0 %v619, 96
    %v781 = vpop.permute.xlu0 %780
    %782 = vrot.lane.b32.xlu0 %v620, 96
    %v783 = vpop.permute.xlu0 %782
    %784 = vrot.lane.b32.xlu0 %v621, 96
    %v785 = vpop.permute.xlu0 %784
    %v791 = vsel %vm678, %v767, 0
    %v794 = vsel %vm678, %v768, 0
    %v797 = vsel %vm678, %v769, 0
    %v800 = vsel %vm678, %v770, 0
    %v803 = vsel %vm579, %v785, 0
    %805 = vmatpush.bf16.msra.mxu0 0
    %806 = vmatpush.bf16.msra.mxu0 0
    %807 = vmatpush.bf16.msra.mxu0 0
    %808 = vmatpush.bf16.msra.mxu0 %v803
    %809 = vmatpush.bf16.msra.mxu0 %v783
    %810 = vmatpush.bf16.msra.mxu0 %v781
    %811 = vmatpush.bf16.msra.mxu0 %v779
    %812 = vmatpush.bf16.msra.mxu0 %v777
    %813 = vmatmul.bf16.gmra.mxu0 %v791
    %v814 = vpop.f32.mrf.mxu0
    %v815 = vadd.f32 0.0, %v814
    %v816 = vpop.f32.mrf.mxu0
    %v817 = vadd.f32 0.0, %v816
    %818 = vmatmul.bf16.gmra.mxu0 %v794
    %v819 = vpop.f32.mrf.mxu0
    %v820 = vadd.f32 0.0, %v819
    %v821 = vpop.f32.mrf.mxu0
    %v822 = vadd.f32 0.0, %v821
    %823 = vmatmul.bf16.gmra.mxu0 %v797
    %v824 = vpop.f32.mrf.mxu0
    %v825 = vadd.f32 0.0, %v824
    %v826 = vpop.f32.mrf.mxu0
    %v827 = vadd.f32 0.0, %v826
    %828 = vmatmul.bf16.gmra.mxu0 %v800
    %v829 = vpop.f32.mrf.mxu0
    %v830 = vadd.f32 0.0, %v829
    %v831 = vpop.f32.mrf.mxu0
    %v832 = vadd.f32 0.0, %v831
    %833 = vdwg.mxu0
    %836 = vrot.lane.b32.xlu0 %v820, 8
    %v837 = vpop.permute.xlu0 %836
    %838 = vrot.lane.b32.xlu0 %v822, 8
    %v839 = vpop.permute.xlu0 %838
    %844 = vrot.lane.b32.xlu0 %v825, 16
    %v845 = vpop.permute.xlu0 %844
    %846 = vrot.lane.b32.xlu0 %v827, 16
    %v847 = vpop.permute.xlu0 %846
    %852 = vrot.lane.b32.xlu0 %v830, 24
    %v853 = vpop.permute.xlu0 %852
    %854 = vrot.lane.b32.xlu0 %v832, 24
    %v855 = vpop.permute.xlu0 %854
    %v858 = vsel %vm143, %v815, %v837
    %v859 = vsel %vm143, %v817, %v839
    %v860 = vsel %vm369, %v858, %v845
    %v861 = vsel %vm369, %v859, %v847
    %v862 = vsel %vm372, %v860, %v853
    %v863 = vsel %vm372, %v861, %v855
    %v864 = vld [vmem:[#allocation4 + $0x30] sm:$0xf]
    %v865 = vld [vmem:[#allocation4 + $0x34] sm:$0xf]
    %v866 = vld [vmem:[#allocation4 + $0x38] sm:$0xf]
    %v867 = vld [vmem:[#allocation4 + $0x3c] sm:$0xf]
    %v868 = vpack.c.bf16 %v863, %v862
    %v869 = vperm.slane %v612, 0
    %v874 = vunpack.c.l.b16 %v864
    %v875 = vunpack.c.l.b16 %v865
    %v876 = vunpack.c.l.b16 %v866
    %v877 = vunpack.c.l.b16 %v867
    %v878 = vpack.c.b16 %v875, %v874
    %v879 = vpack.c.b16 %v877, %v876
    %v883 = vsel %vm88, %v868, 0
    %885 = vmatpush.bf16.msra.mxu0 0
    %886 = vmatpush.bf16.msra.mxu0 0
    %887 = vmatpush.bf16.msra.mxu0 0
    %888 = vmatpush.bf16.msra.mxu0 0
    %889 = vmatpush.bf16.msra.mxu0 0
    %890 = vmatpush.bf16.msra.mxu0 0
    %891 = vmatpush.bf16.msra.mxu0 %v879
    %892 = vmatpush.bf16.msra.mxu0 %v878
    %893 = vmatmul.bf16.gmra.mxu0 %v883
    %v894 = vpop.f32.mrf.mxu0
    %v895 = vadd.f32 %v869, %v894
    %v896 = vpop.f32.mrf.mxu0
    %v897 = vadd.f32 %v869, %v896
    %898 = vdwg.mxu0
    %v899 = vadd.f32 %v467, %v895
    %v900 = vadd.f32 %v468, %v897
    %v901 = vsel %vm88, %v899, 0.0
    %902 = vadd.xlane.f32.xlu0 %v901
    %v903 = vpop.xlane.xlu0 %902
    %v904 = vsel %vm88, %v900, 0.0
    %905 = vadd.xlane.f32.xlu0 %v904
    %v906 = vpop.xlane.xlu0 %905
    %v907 = vmul.f32 %v903, %v424
    %v908 = vmul.f32 %v906, %v424
    %v909 = vsub.f32 %v899, %v907
    %v910 = vsub.f32 %v900, %v908
    %v911 = vmul.f32 %v909, %v909
    %v912 = vmul.f32 %v910, %v910
    %v913 = vsel %vm88, %v911, 0.0
    %914 = vadd.xlane.f32.xlu0 %v913
    %v915 = vpop.xlane.xlu0 %914
    %v916 = vsel %vm88, %v912, 0.0
    %917 = vadd.xlane.f32.xlu0 %v916
    %v918 = vpop.xlane.xlu0 %917
    %v919 = vmul.f32 %v915, %v424
    %v920 = vmul.f32 %v918, %v424
    %v921 = vadd.f32 %v919, 1e-05
    %v922 = vadd.f32 %v920, 1e-05
    %v923 = vrsqrt.pop %v921
    %v924 = vmul.f32 %v923, %v921
    %v925 = vmul.f32 %v924, %v923
    %v926 = vmul.f32 0.5, %v925
    %v927 = vsub.f32 1.5, %v926
    %v928 = vmul.f32 %v923, %v927
    %vm929 = vweird.f32 %v921
    %vm930 = vweird.f32 %v923
    %vm931 = vmor %vm929, %vm930
    %v932 = vsel %vm931, %v923, %v928
    %v933 = vrsqrt.pop %v922
    %v934 = vmul.f32 %v933, %v922
    %v935 = vmul.f32 %v934, %v933
    %v936 = vmul.f32 0.5, %v935
    %v937 = vsub.f32 1.5, %v936
    %v938 = vmul.f32 %v933, %v937
    %vm939 = vweird.f32 %v922
    %vm940 = vweird.f32 %v933
    %vm941 = vmor %vm939, %vm940
    %v942 = vsel %vm941, %v933, %v938
    %v943 = vmul.f32 %v909, %v932
    %v944 = vmul.f32 %v910, %v942
    %v945 = vperm.slane %v68, 2
    %v946 = vmul.f32 %v943, %v945
    %v947 = vmul.f32 %v944, %v945
    %v948 = vperm.slane %v68, 3
    %v949 = vadd.f32 %v946, %v948
    %v950 = vadd.f32 %v947, %v948
    %v951 = vld [vmem:[#allocation4 + $0x40] sm:$0xf]
    %v952 = vld [vmem:[#allocation4 + $0x44] sm:$0xf]
    %v953 = vld [vmem:[#allocation4 + $0x48] sm:$0xf]
    %v954 = vld [vmem:[#allocation4 + $0x4c] sm:$0xf]
    %v955 = vpack.c.bf16 %v950, %v949
    %v956 = vld [vmem:[#allocation2 + $0x28] sm:$0x1]
    %v957 = vperm.slane %v956, 0
    %v962 = vunpack.c.l.b16 %v951
    %v963 = vunpack.c.l.b16 %v952
    %v964 = vunpack.c.l.b16 %v953
    %v965 = vunpack.c.l.b16 %v954
    %v966 = vpack.c.b16 %v963, %v962
    %v967 = vpack.c.b16 %v965, %v964
    %v971 = vsel %vm88, %v955, 0
    %973 = vmatpush.bf16.msra.mxu0 0
    %974 = vmatpush.bf16.msra.mxu0 0
    %975 = vmatpush.bf16.msra.mxu0 0
    %976 = vmatpush.bf16.msra.mxu0 0
    %977 = vmatpush.bf16.msra.mxu0 0
    %978 = vmatpush.bf16.msra.mxu0 0
    %979 = vmatpush.bf16.msra.mxu0 %v967
    %980 = vmatpush.bf16.msra.mxu0 %v966
    %981 = vmatmul.bf16.gmra.mxu0 %v971
    %v982 = vpop.f32.mrf.mxu0
    %v983 = vadd.f32 %v957, %v982
    %v984 = vpop.f32.mrf.mxu0
    %v985 = vadd.f32 %v957, %v984
    %986 = vdwg.mxu0
    %v987 = vmax.f32 %v983, 0.0
    %v988 = vmax.f32 %v985, 0.0
    %v989 = vld [vmem:[#allocation4 + $0x50] sm:$0xf]
    %v990 = vld [vmem:[#allocation4 + $0x54] sm:$0xf]
    %v991 = vld [vmem:[#allocation4 + $0x58] sm:$0xf]
    %v992 = vld [vmem:[#allocation4 + $0x5c] sm:$0xf]
    %v993 = vld [vmem:[#allocation4 + $0x60] sm:$0xf]
    %v994 = vld [vmem:[#allocation4 + $0x64] sm:$0xf]
    %v995 = vld [vmem:[#allocation4 + $0x68] sm:$0xf]
    %v996 = vld [vmem:[#allocation4 + $0x6c] sm:$0xf]
    %v997 = vpack.c.bf16 %v988, %v987
    %v998 = vld [vmem:[#allocation2 + $0x30] sm:$0x1]
    %v999 = vperm.slane %v998, 0
    %v1008 = vunpack.c.l.b16 %v989
    %v1009 = vunpack.c.l.b16 %v990
    %v1010 = vunpack.c.l.b16 %v991
    %v1011 = vunpack.c.l.b16 %v992
    %v1012 = vunpack.c.l.b16 %v993
    %v1013 = vunpack.c.l.b16 %v994
    %v1014 = vunpack.c.l.b16 %v995
    %v1015 = vunpack.c.l.b16 %v996
    %v1016 = vpack.c.b16 %v1009, %v1008
    %v1017 = vpack.c.b16 %v1011, %v1010
    %v1018 = vpack.c.b16 %v1013, %v1012
    %v1019 = vpack.c.b16 %v1015, %v1014
    %v1025 = vsel %vm197, %v997, 0
    %1027 = vmatpush.bf16.msra.mxu0 0
    %1028 = vmatpush.bf16.msra.mxu0 0
    %1029 = vmatpush.bf16.msra.mxu0 0
    %1030 = vmatpush.bf16.msra.mxu0 0
    %1031 = vmatpush.bf16.msra.mxu0 %v1019
    %1032 = vmatpush.bf16.msra.mxu0 %v1018
    %1033 = vmatpush.bf16.msra.mxu0 %v1017
    %1034 = vmatpush.bf16.msra.mxu0 %v1016
    %1035 = vmatmul.bf16.gmra.mxu0 %v1025
    %v1036 = vpop.f32.mrf.mxu0
    %v1037 = vadd.f32 %v999, %v1036
    %v1038 = vpop.f32.mrf.mxu0
    %v1039 = vadd.f32 %v999, %v1038
    %1040 = vdwg.mxu0
    %v1041 = vadd.f32 %v949, %v1037
    %v1042 = vadd.f32 %v950, %v1039
    %v1043 = vsel %vm88, %v1041, 0.0
    %1044 = vadd.xlane.f32.xlu0 %v1043
    %v1045 = vpop.xlane.xlu0 %1044
    %v1046 = vsel %vm88, %v1042, 0.0
    %1047 = vadd.xlane.f32.xlu0 %v1046
    %v1048 = vpop.xlane.xlu0 %1047
    %v1049 = vmul.f32 %v1045, %v424
    %v1050 = vmul.f32 %v1048, %v424
    %v1051 = vsub.f32 %v1041, %v1049
    %v1052 = vsub.f32 %v1042, %v1050
    %v1053 = vmul.f32 %v1051, %v1051
    %v1054 = vmul.f32 %v1052, %v1052
    %v1055 = vsel %vm88, %v1053, 0.0
    %1056 = vadd.xlane.f32.xlu0 %v1055
    %v1057 = vpop.xlane.xlu0 %1056
    %v1058 = vsel %vm88, %v1054, 0.0
    %1059 = vadd.xlane.f32.xlu0 %v1058
    %v1060 = vpop.xlane.xlu0 %1059
    %v1061 = vmul.f32 %v1057, %v424
    %v1062 = vmul.f32 %v1060, %v424
    %v1063 = vadd.f32 %v1061, 1e-05
    %v1064 = vadd.f32 %v1062, 1e-05
    %v1065 = vrsqrt.pop %v1063
    %v1066 = vmul.f32 %v1065, %v1063
    %v1067 = vmul.f32 %v1066, %v1065
    %v1068 = vmul.f32 0.5, %v1067
    %v1069 = vsub.f32 1.5, %v1068
    %v1070 = vmul.f32 %v1065, %v1069
    %vm1071 = vweird.f32 %v1063
    %vm1072 = vweird.f32 %v1065
    %vm1073 = vmor %vm1071, %vm1072
    %v1074 = vsel %vm1073, %v1065, %v1070
    %v1075 = vrsqrt.pop %v1064
    %v1076 = vmul.f32 %v1075, %v1064
    %v1077 = vmul.f32 %v1076, %v1075
    %v1078 = vmul.f32 0.5, %v1077
    %v1079 = vsub.f32 1.5, %v1078
    %v1080 = vmul.f32 %v1075, %v1079
    %vm1081 = vweird.f32 %v1064
    %vm1082 = vweird.f32 %v1075
    %vm1083 = vmor %vm1081, %vm1082
    %v1084 = vsel %vm1083, %v1075, %v1080
    %v1085 = vmul.f32 %v1051, %v1074
    %v1086 = vmul.f32 %v1052, %v1084
    %v1087 = vperm.slane %v68, 4
    %v1088 = vmul.f32 %v1085, %v1087
    %v1089 = vmul.f32 %v1086, %v1087
    %v1090 = vperm.slane %v68, 5
    %v1091 = vadd.f32 %v1088, %v1090
    %v1092 = vadd.f32 %v1089, %v1090
    %v1093 = vld [vmem:[#allocation2 + $0x58] sm:$0x3f]
    %v1094 = vld [vmem:[#allocation4 + $0x70] sm:$0xf]
    %v1095 = vld [vmem:[#allocation4 + $0x74] sm:$0xf]
    %v1096 = vld [vmem:[#allocation4 + $0x78] sm:$0xf]
    %v1097 = vld [vmem:[#allocation4 + $0x7c] sm:$0xf]
    %v1098 = vpack.c.bf16 %v1092, %v1091
    %v1099 = vld [vmem:[#allocation2 + $0x38] sm:$0x1]
    %v1100 = vperm.slane %v1099, 0
    %v1105 = vunpack.c.l.b16 %v1094
    %v1106 = vunpack.c.l.b16 %v1095
    %v1107 = vunpack.c.l.b16 %v1096
    %v1108 = vunpack.c.l.b16 %v1097
    %v1109 = vpack.c.b16 %v1106, %v1105
    %v1110 = vpack.c.b16 %v1108, %v1107
    %v1114 = vsel %vm88, %v1098, 0
    %1116 = vmatpush.bf16.msra.mxu0 0
    %1117 = vmatpush.bf16.msra.mxu0 0
    %1118 = vmatpush.bf16.msra.mxu0 0
    %1119 = vmatpush.bf16.msra.mxu0 0
    %1120 = vmatpush.bf16.msra.mxu0 0
    %1121 = vmatpush.bf16.msra.mxu0 0
    %1122 = vmatpush.bf16.msra.mxu0 %v1110
    %1123 = vmatpush.bf16.msra.mxu0 %v1109
    %1124 = vmatmul.bf16.gmra.mxu0 %v1114
    %v1125 = vpop.f32.mrf.mxu0
    %v1126 = vadd.f32 %v1100, %v1125
    %v1127 = vpop.f32.mrf.mxu0
    %v1128 = vadd.f32 %v1100, %v1127
    %1129 = vdwg.mxu0
    %1132 = vrot.lane.b32.xlu0 %v1126, 120
    %v1133 = vpop.permute.xlu0 %1132
    %1134 = vrot.lane.b32.xlu0 %v1128, 120
    %v1135 = vpop.permute.xlu0 %1134
    %1138 = vrot.lane.b32.xlu0 %v1126, 112
    %v1139 = vpop.permute.xlu0 %1138
    %1140 = vrot.lane.b32.xlu0 %v1128, 112
    %v1141 = vpop.permute.xlu0 %1140
    %1144 = vrot.lane.b32.xlu0 %v1126, 104
    %v1145 = vpop.permute.xlu0 %1144
    %1146 = vrot.lane.b32.xlu0 %v1128, 104
    %v1147 = vpop.permute.xlu0 %1146
    %v1150 = vld [vmem:[#allocation2 + $0x48] sm:$0x1]
    %v1151 = vpack.c.bf16 %v1128, %v1126
    %v1152 = vpack.c.bf16 %v1135, %v1133
    %v1153 = vpack.c.bf16 %v1141, %v1139
    %v1154 = vpack.c.bf16 %v1147, %v1145
    %1159 = vrot.lane.b32.xlu0 %v1151, 96
    %v1160 = vpop.permute.xlu0 %1159
    %1161 = vrot.lane.b32.xlu0 %v1152, 96
    %v1162 = vpop.permute.xlu0 %1161
    %1163 = vrot.lane.b32.xlu0 %v1153, 96
    %v1164 = vpop.permute.xlu0 %1163
    %1165 = vrot.lane.b32.xlu0 %v1154, 96
    %v1166 = vpop.permute.xlu0 %1165
    %v1168 = vsel %vm143, %v1151, 0
    %v1171 = vsel %vm143, %v1152, 0
    %v1174 = vsel %vm143, %v1153, 0
    %v1177 = vsel %vm143, %v1154, 0
    %v1180 = vsel %vm143, %v1160, 0
    %v1183 = vsel %vm143, %v1162, 0
    %v1186 = vsel %vm143, %v1164, 0
    %v1189 = vsel %vm143, %v1166, 0
    %1191 = vmatpush.bf16.xpose.msra.mxu0 0
    %1192 = vmatpush.bf16.xpose.msra.mxu0 0
    %1193 = vmatpush.bf16.xpose.msra.mxu0 0
    %1194 = vmatpush.bf16.xpose.msra.mxu0 0
    %1195 = vmatpush.bf16.xpose.msra.mxu0 %v1189
    %1196 = vmatpush.bf16.xpose.msra.mxu0 %v1186
    %1197 = vmatpush.bf16.xpose.msra.mxu0 %v1183
    %1198 = vmatpush.bf16.xpose.msra.mxu0 %v1180
    %1199 = vmatmul.bf16.gmra.mxu0 %v1168
    %v1200 = vpop.f32.mrf.mxu0
    %v1201 = vadd.f32 %v52, %v1200
    %v1202 = vpop.f32.mrf.mxu0
    %v1203 = vadd.f32 %v53, %v1202
    %1204 = vmatmul.bf16.gmra.mxu0 %v1171
    %v1205 = vpop.f32.mrf.mxu0
    %v1206 = vadd.f32 %v54, %v1205
    %v1207 = vpop.f32.mrf.mxu0
    %v1208 = vadd.f32 %v55, %v1207
    %1209 = vmatmul.bf16.gmra.mxu0 %v1174
    %v1210 = vpop.f32.mrf.mxu0
    %v1211 = vadd.f32 %v56, %v1210
    %v1212 = vpop.f32.mrf.mxu0
    %v1213 = vadd.f32 %v57, %v1212
    %1214 = vmatmul.bf16.gmra.mxu0 %v1177
    %v1215 = vpop.f32.mrf.mxu0
    %v1216 = vadd.f32 %v58, %v1215
    %v1217 = vpop.f32.mrf.mxu0
    %v1218 = vadd.f32 %v59, %v1217
    %1219 = vdwg.mxu0
    %v1220 = vsel %vm197, %v1201, -inf
    %1221 = vmax.xlane.f32.xlu0 %v1220
    %v1222 = vpop.xlane.xlu0 %1221
    %v1223 = vsel %vm197, %v1203, -inf
    %1224 = vmax.xlane.f32.xlu0 %v1223
    %v1225 = vpop.xlane.xlu0 %1224
    %v1226 = vsel %vm197, %v1206, -inf
    %1227 = vmax.xlane.f32.xlu0 %v1226
    %v1228 = vpop.xlane.xlu0 %1227
    %v1229 = vsel %vm197, %v1208, -inf
    %1230 = vmax.xlane.f32.xlu0 %v1229
    %v1231 = vpop.xlane.xlu0 %1230
    %v1232 = vsel %vm197, %v1211, -inf
    %1233 = vmax.xlane.f32.xlu0 %v1232
    %v1234 = vpop.xlane.xlu0 %1233
    %v1235 = vsel %vm197, %v1213, -inf
    %1236 = vmax.xlane.f32.xlu0 %v1235
    %v1237 = vpop.xlane.xlu0 %1236
    %v1238 = vsel %vm197, %v1216, -inf
    %1239 = vmax.xlane.f32.xlu0 %v1238
    %v1240 = vpop.xlane.xlu0 %1239
    %v1241 = vsel %vm197, %v1218, -inf
    %1242 = vmax.xlane.f32.xlu0 %v1241
    %v1243 = vpop.xlane.xlu0 %1242
    %v1244 = vsub.f32 %v1201, %v1222
    %v1245 = vsub.f32 %v1203, %v1225
    %v1246 = vsub.f32 %v1206, %v1228
    %v1247 = vsub.f32 %v1208, %v1231
    %v1248 = vsub.f32 %v1211, %v1234
    %v1249 = vsub.f32 %v1213, %v1237
    %v1250 = vsub.f32 %v1216, %v1240
    %v1251 = vsub.f32 %v1218, %v1243
    %v1252 = vmul.f32 %v1244, 1.442695
    %v1253 = vpow.pop %v1252
    %v1254 = vmul.f32 %v1245, 1.442695
    %v1255 = vpow.pop %v1254
    %v1256 = vmul.f32 %v1246, 1.442695
    %v1257 = vpow.pop %v1256
    %v1258 = vmul.f32 %v1247, 1.442695
    %v1259 = vpow.pop %v1258
    %v1260 = vmul.f32 %v1248, 1.442695
    %v1261 = vpow.pop %v1260
    %v1262 = vmul.f32 %v1249, 1.442695
    %v1263 = vpow.pop %v1262
    %v1264 = vmul.f32 %v1250, 1.442695
    %v1265 = vpow.pop %v1264
    %v1266 = vmul.f32 %v1251, 1.442695
    %v1267 = vpow.pop %v1266
    %v1268 = vsel %vm197, %v1253, 0.0
    %1269 = vadd.xlane.f32.xlu0 %v1268
    %v1270 = vpop.xlane.xlu0 %1269
    %v1271 = vsel %vm197, %v1255, 0.0
    %1272 = vadd.xlane.f32.xlu0 %v1271
    %v1273 = vpop.xlane.xlu0 %1272
    %v1274 = vsel %vm197, %v1257, 0.0
    %1275 = vadd.xlane.f32.xlu0 %v1274
    %v1276 = vpop.xlane.xlu0 %1275
    %v1277 = vsel %vm197, %v1259, 0.0
    %1278 = vadd.xlane.f32.xlu0 %v1277
    %v1279 = vpop.xlane.xlu0 %1278
    %v1280 = vsel %vm197, %v1261, 0.0
    %1281 = vadd.xlane.f32.xlu0 %v1280
    %v1282 = vpop.xlane.xlu0 %1281
    %v1283 = vsel %vm197, %v1263, 0.0
    %1284 = vadd.xlane.f32.xlu0 %v1283
    %v1285 = vpop.xlane.xlu0 %1284
    %v1286 = vsel %vm197, %v1265, 0.0
    %1287 = vadd.xlane.f32.xlu0 %v1286
    %v1288 = vpop.xlane.xlu0 %1287
    %v1289 = vsel %vm197, %v1267, 0.0
    %1290 = vadd.xlane.f32.xlu0 %v1289
    %v1291 = vpop.xlane.xlu0 %1290
    %v1292 = vrcp.pop %v1270
    %v1293 = vrcp.pop %v1273
    %v1294 = vrcp.pop %v1276
    %v1295 = vrcp.pop %v1279
    %v1296 = vrcp.pop %v1282
    %v1297 = vrcp.pop %v1285
    %v1298 = vrcp.pop %v1288
    %v1299 = vrcp.pop %v1291
    %v1300 = vmul.f32 %v1253, %v1292
    %v1301 = vmul.f32 %v1255, %v1293
    %v1302 = vmul.f32 %v1257, %v1294
    %v1303 = vmul.f32 %v1259, %v1295
    %v1304 = vmul.f32 %v1261, %v1296
    %v1305 = vmul.f32 %v1263, %v1297
    %v1306 = vmul.f32 %v1265, %v1298
    %v1307 = vmul.f32 %v1267, %v1299
    %v1308 = vpack.c.bf16 %v1301, %v1300
    %v1309 = vpack.c.bf16 %v1303, %v1302
    %v1310 = vpack.c.bf16 %v1305, %v1304
    %v1311 = vpack.c.bf16 %v1307, %v1306
    %1312 = vrot.lane.b32.xlu0 %v1151, 64
    %v1313 = vpop.permute.xlu0 %1312
    %1314 = vrot.lane.b32.xlu0 %v1152, 64
    %v1315 = vpop.permute.xlu0 %1314
    %1316 = vrot.lane.b32.xlu0 %v1153, 64
    %v1317 = vpop.permute.xlu0 %1316
    %1318 = vrot.lane.b32.xlu0 %v1154, 64
    %v1319 = vpop.permute.xlu0 %1318
    %v1325 = vsel %vm197, %v1308, 0
    %v1328 = vsel %vm197, %v1309, 0
    %v1331 = vsel %vm197, %v1310, 0
    %v1334 = vsel %vm197, %v1311, 0
    %1336 = vmatpush.bf16.msra.mxu0 0
    %1337 = vmatpush.bf16.msra.mxu0 0
    %1338 = vmatpush.bf16.msra.mxu0 0
    %1339 = vmatpush.bf16.msra.mxu0 0
    %1340 = vmatpush.bf16.msra.mxu0 %v1319
    %1341 = vmatpush.bf16.msra.mxu0 %v1317
    %1342 = vmatpush.bf16.msra.mxu0 %v1315
    %1343 = vmatpush.bf16.msra.mxu0 %v1313
    %1344 = vmatmul.bf16.gmra.mxu0 %v1325
    %v1345 = vpop.f32.mrf.mxu0
    %v1346 = vadd.f32 0.0, %v1345
    %v1347 = vpop.f32.mrf.mxu0
    %v1348 = vadd.f32 0.0, %v1347
    %1349 = vmatmul.bf16.gmra.mxu0 %v1328
    %v1350 = vpop.f32.mrf.mxu0
    %v1351 = vadd.f32 0.0, %v1350
    %v1352 = vpop.f32.mrf.mxu0
    %v1353 = vadd.f32 0.0, %v1352
    %1354 = vmatmul.bf16.gmra.mxu0 %v1331
    %v1355 = vpop.f32.mrf.mxu0
    %v1356 = vadd.f32 0.0, %v1355
    %v1357 = vpop.f32.mrf.mxu0
    %v1358 = vadd.f32 0.0, %v1357
    %1359 = vmatmul.bf16.gmra.mxu0 %v1334
    %v1360 = vpop.f32.mrf.mxu0
    %v1361 = vadd.f32 0.0, %v1360
    %v1362 = vpop.f32.mrf.mxu0
    %v1363 = vadd.f32 0.0, %v1362
    %1364 = vdwg.mxu0
    %1367 = vrot.lane.b32.xlu0 %v1351, 8
    %v1368 = vpop.permute.xlu0 %1367
    %1369 = vrot.lane.b32.xlu0 %v1353, 8
    %v1370 = vpop.permute.xlu0 %1369
    %1375 = vrot.lane.b32.xlu0 %v1356, 16
    %v1376 = vpop.permute.xlu0 %1375
    %1377 = vrot.lane.b32.xlu0 %v1358, 16
    %v1378 = vpop.permute.xlu0 %1377
    %1383 = vrot.lane.b32.xlu0 %v1361, 24
    %v1384 = vpop.permute.xlu0 %1383
    %1385 = vrot.lane.b32.xlu0 %v1363, 24
    %v1386 = vpop.permute.xlu0 %1385
    %v1389 = vsel %vm143, %v1346, %v1368
    %v1390 = vsel %vm143, %v1348, %v1370
    %v1391 = vsel %vm369, %v1389, %v1376
    %v1392 = vsel %vm369, %v1390, %v1378
    %v1393 = vsel %vm372, %v1391, %v1384
    %v1394 = vsel %vm372, %v1392, %v1386
    %v1395 = vld [vmem:[#allocation4 + $0x90] sm:$0xf]
    %v1396 = vld [vmem:[#allocation4 + $0x94] sm:$0xf]
    %v1397 = vld [vmem:[#allocation4 + $0x98] sm:$0xf]
    %v1398 = vld [vmem:[#allocation4 + $0x9c] sm:$0xf]
    %v1399 = vpack.c.bf16 %v1394, %v1393
    %v1400 = vperm.slane %v1150, 0
    %v1405 = vunpack.c.l.b16 %v1395
    %v1406 = vunpack.c.l.b16 %v1396
    %v1407 = vunpack.c.l.b16 %v1397
    %v1408 = vunpack.c.l.b16 %v1398
    %v1409 = vpack.c.b16 %v1406, %v1405
    %v1410 = vpack.c.b16 %v1408, %v1407
    %v1414 = vsel %vm88, %v1399, 0
    %1416 = vmatpush.bf16.msra.mxu0 0
    %1417 = vmatpush.bf16.msra.mxu0 0
    %1418 = vmatpush.bf16.msra.mxu0 0
    %1419 = vmatpush.bf16.msra.mxu0 0
    %1420 = vmatpush.bf16.msra.mxu0 0
    %1421 = vmatpush.bf16.msra.mxu0 0
    %1422 = vmatpush.bf16.msra.mxu0 %v1410
    %1423 = vmatpush.bf16.msra.mxu0 %v1409
    %1424 = vmatmul.bf16.gmra.mxu0 %v1414
    %v1425 = vpop.f32.mrf.mxu0
    %v1426 = vadd.f32 %v1400, %v1425
    %v1427 = vpop.f32.mrf.mxu0
    %v1428 = vadd.f32 %v1400, %v1427
    %1429 = vdwg.mxu0
    %v1430 = vadd.f32 %v1091, %v1426
    %v1431 = vadd.f32 %v1092, %v1428
    %v1432 = vsel %vm88, %v1430, 0.0
    %1433 = vadd.xlane.f32.xlu0 %v1432
    %v1434 = vpop.xlane.xlu0 %1433
    %v1435 = vsel %vm88, %v1431, 0.0
    %1436 = vadd.xlane.f32.xlu0 %v1435
    %v1437 = vpop.xlane.xlu0 %1436
    %v1438 = vmul.f32 %v1434, %v424
    %v1439 = vmul.f32 %v1437, %v424
    %v1440 = vsub.f32 %v1430, %v1438
    %v1441 = vsub.f32 %v1431, %v1439
    %v1442 = vmul.f32 %v1440, %v1440
    %v1443 = vmul.f32 %v1441, %v1441
    %v1444 = vsel %vm88, %v1442, 0.0
    %1445 = vadd.xlane.f32.xlu0 %v1444
    %v1446 = vpop.xlane.xlu0 %1445
    %v1447 = vsel %vm88, %v1443, 0.0
    %1448 = vadd.xlane.f32.xlu0 %v1447
    %v1449 = vpop.xlane.xlu0 %1448
    %v1450 = vmul.f32 %v1446, %v424
    %v1451 = vmul.f32 %v1449, %v424
    %v1452 = vadd.f32 %v1450, 1e-05
    %v1453 = vadd.f32 %v1451, 1e-05
    %v1454 = vrsqrt.pop %v1452
    %v1455 = vmul.f32 %v1454, %v1452
    %v1456 = vmul.f32 %v1455, %v1454
    %v1457 = vmul.f32 0.5, %v1456
    %v1458 = vsub.f32 1.5, %v1457
    %v1459 = vmul.f32 %v1454, %v1458
    %vm1460 = vweird.f32 %v1452
    %vm1461 = vweird.f32 %v1454
    %vm1462 = vmor %vm1460, %vm1461
    %v1463 = vsel %vm1462, %v1454, %v1459
    %v1464 = vrsqrt.pop %v1453
    %v1465 = vmul.f32 %v1464, %v1453
    %v1466 = vmul.f32 %v1465, %v1464
    %v1467 = vmul.f32 0.5, %v1466
    %v1468 = vsub.f32 1.5, %v1467
    %v1469 = vmul.f32 %v1464, %v1468
    %vm1470 = vweird.f32 %v1453
    %vm1471 = vweird.f32 %v1464
    %vm1472 = vmor %vm1470, %vm1471
    %v1473 = vsel %vm1472, %v1464, %v1469
    %v1474 = vmul.f32 %v1440, %v1463
    %v1475 = vmul.f32 %v1441, %v1473
    %v1476 = vperm.slane %v1093, 0
    %v1477 = vmul.f32 %v1474, %v1476
    %v1478 = vmul.f32 %v1475, %v1476
    %v1479 = vperm.slane %v1093, 1
    %v1480 = vadd.f32 %v1477, %v1479
    %v1481 = vadd.f32 %v1478, %v1479
    %v1482 = vld [vmem:[#allocation4 + $0x80] sm:$0xf]
    %v1483 = vld [vmem:[#allocation4 + $0x84] sm:$0xf]
    %v1484 = vld [vmem:[#allocation4 + $0x88] sm:$0xf]
    %v1485 = vld [vmem:[#allocation4 + $0x8c] sm:$0xf]
    %v1486 = vld [vmem:[#allocation2 + $0x40] sm:$0x1]
    %v1487 = vpack.c.bf16 %v1481, %v1480
    %v1488 = vperm.slane %v1486, 0
    %v1493 = vunpack.c.l.b16 %v1482
    %v1494 = vunpack.c.l.b16 %v1483
    %v1495 = vunpack.c.l.b16 %v1484
    %v1496 = vunpack.c.l.b16 %v1485
    %v1497 = vpack.c.b16 %v1494, %v1493
    %v1498 = vpack.c.b16 %v1496, %v1495
    %v1502 = vsel %vm88, %v1487, 0
    %1504 = vmatpush.bf16.msra.mxu0 0
    %1505 = vmatpush.bf16.msra.mxu0 0
    %1506 = vmatpush.bf16.msra.mxu0 0
    %1507 = vmatpush.bf16.msra.mxu0 0
    %1508 = vmatpush.bf16.msra.mxu0 0
    %1509 = vmatpush.bf16.msra.mxu0 0
    %1510 = vmatpush.bf16.msra.mxu0 %v1498
    %1511 = vmatpush.bf16.msra.mxu0 %v1497
    %1512 = vmatmul.bf16.gmra.mxu0 %v1502
    %v1513 = vpop.f32.mrf.mxu0
    %v1514 = vadd.f32 %v1488, %v1513
    %v1515 = vpop.f32.mrf.mxu0
    %v1516 = vadd.f32 %v1488, %v1515
    %1517 = vdwg.mxu0
    %1518 = vrot.lane.b32.xlu0 %v1497, 96
    %v1519 = vpop.permute.xlu0 %1518
    %1520 = vrot.lane.b32.xlu0 %v1498, 96
    %v1521 = vpop.permute.xlu0 %1520
    %1525 = vrot.lane.b32.xlu0 %v1488, 96
    %v1526 = vpop.permute.xlu0 %1525
    %1528 = vmatpush.bf16.msra.mxu0 0
    %1529 = vmatpush.bf16.msra.mxu0 0
    %1530 = vmatpush.bf16.msra.mxu0 0
    %1531 = vmatpush.bf16.msra.mxu0 0
    %1532 = vmatpush.bf16.msra.mxu0 0
    %1533 = vmatpush.bf16.msra.mxu0 0
    %1534 = vmatpush.bf16.msra.mxu0 %v1521
    %1535 = vmatpush.bf16.msra.mxu0 %v1519
    %1536 = vmatmul.bf16.gmra.mxu0 %v518
    %v1537 = vpop.f32.mrf.mxu0
    %v1538 = vadd.f32 %v1526, %v1537
    %v1539 = vpop.f32.mrf.mxu0
    %v1540 = vadd.f32 %v1526, %v1539
    %1541 = vmatmul.bf16.gmra.mxu0 %v521
    %v1542 = vpop.f32.mrf.mxu0
    %v1543 = vadd.f32 %v1526, %v1542
    %v1544 = vpop.f32.mrf.mxu0
    %1545 = vdwg.mxu0
    %1548 = vrot.lane.b32.xlu0 %v1514, 120
    %v1549 = vpop.permute.xlu0 %1548
    %1550 = vrot.lane.b32.xlu0 %v1516, 120
    %v1551 = vpop.permute.xlu0 %1550
    %1554 = vrot.lane.b32.xlu0 %v1514, 112
    %v1555 = vpop.permute.xlu0 %1554
    %1556 = vrot.lane.b32.xlu0 %v1516, 112
    %v1557 = vpop.permute.xlu0 %1556
    %1560 = vrot.lane.b32.xlu0 %v1514, 104
    %v1561 = vpop.permute.xlu0 %1560
    %1562 = vrot.lane.b32.xlu0 %v1516, 104
    %v1563 = vpop.permute.xlu0 %1562
    %v1569 = vrot.slane %v1538, 6
    %v1570 = vrot.slane %v1540, 6
    %v1571 = vsel %vm564, %v1569, %v1570
    %v1572 = vrot.slane %v1543, 6
    %v1573 = vsel %vm564, %v1570, %v1572
    %1574 = vrot.lane.b32.xlu0 %v1569, 120
    %v1575 = vpop.permute.xlu0 %1574
    %1576 = vrot.lane.b32.xlu0 %v1571, 120
    %v1577 = vpop.permute.xlu0 %1576
    %1578 = vrot.lane.b32.xlu0 %v1573, 120
    %v1579 = vpop.permute.xlu0 %1578
    %v1583 = vrot.slane %v1538, 4
    %v1584 = vrot.slane %v1540, 4
    %v1585 = vsel %vm579, %v1583, %v1584
    %v1586 = vrot.slane %v1543, 4
    %v1587 = vsel %vm579, %v1584, %v1586
    %1588 = vrot.lane.b32.xlu0 %v1583, 112
    %v1589 = vpop.permute.xlu0 %1588
    %1590 = vrot.lane.b32.xlu0 %v1585, 112
    %v1591 = vpop.permute.xlu0 %1590
    %1592 = vrot.lane.b32.xlu0 %v1587, 112
    %v1593 = vpop.permute.xlu0 %1592
    %v1597 = vrot.slane %v1538, 2
    %v1598 = vrot.slane %v1540, 2
    %v1599 = vsel %vm594, %v1597, %v1598
    %v1600 = vrot.slane %v1543, 2
    %v1601 = vsel %vm594, %v1598, %v1600
    %1602 = vrot.lane.b32.xlu0 %v1597, 104
    %v1603 = vpop.permute.xlu0 %1602
    %1604 = vrot.lane.b32.xlu0 %v1599, 104
    %v1605 = vpop.permute.xlu0 %1604
    %1606 = vrot.lane.b32.xlu0 %v1601, 104
    %v1607 = vpop.permute.xlu0 %1606
    %v1611 = vsel %vm564, %v1543, %v1575
    %v1612 = vsel %vm579, %v1579, %v1589
    %v1613 = vsel %vm594, %v1593, %v1603
    %v1614 = vld [vmem:[#allocation2 + $0x50] sm:$0x1]
    %v1615 = vpack.c.bf16 %v1516, %v1514
    %v1616 = vpack.c.bf16 %v1551, %v1549
    %v1617 = vpack.c.bf16 %v1557, %v1555
    %v1618 = vpack.c.bf16 %v1563, %v1561
    %v1619 = vpack.c.bf16 %v1540, %v1538
    %v1620 = vpack.c.bf16 %v1577, %v1611
    %v1621 = vpack.c.bf16 %v1591, %v1612
    %v1622 = vpack.c.bf16 %v1605, %v1613
    %v1623 = vpack.c.bf16 %v1607, %v1607
    %v1625 = vsel %vm143, %v1615, 0
    %v1628 = vsel %vm143, %v1616, 0
    %v1631 = vsel %vm143, %v1617, 0
    %v1634 = vsel %vm143, %v1618, 0
    %v1637 = vsel %vm143, %v1619, 0
    %v1640 = vsel %vm143, %v1620, 0
    %v1643 = vsel %vm143, %v1621, 0
    %v1646 = vsel %vm143, %v1622, 0
    %v1649 = vsel %vm143, %v1623, 0
    %1651 = vmatpush.bf16.xpose.msra.mxu0 0
    %1652 = vmatpush.bf16.xpose.msra.mxu0 0
    %1653 = vmatpush.bf16.xpose.msra.mxu0 0
    %1654 = vmatpush.bf16.xpose.msra.mxu0 %v1649
    %1655 = vmatpush.bf16.xpose.msra.mxu0 %v1646
    %1656 = vmatpush.bf16.xpose.msra.mxu0 %v1643
    %1657 = vmatpush.bf16.xpose.msra.mxu0 %v1640
    %1658 = vmatpush.bf16.xpose.msra.mxu0 %v1637
    %1659 = vmatmul.bf16.gmra.mxu0 %v1625
    %v1660 = vpop.f32.mrf.mxu0
    %v1661 = vadd.f32 %v60, %v1660
    %v1662 = vpop.f32.mrf.mxu0
    %v1663 = vadd.f32 %v61, %v1662
    %1664 = vmatmul.bf16.gmra.mxu0 %v1628
    %v1665 = vpop.f32.mrf.mxu0
    %v1666 = vadd.f32 %v62, %v1665
    %v1667 = vpop.f32.mrf.mxu0
    %v1668 = vadd.f32 %v63, %v1667
    %1669 = vmatmul.bf16.gmra.mxu0 %v1631
    %v1670 = vpop.f32.mrf.mxu0
    %v1671 = vadd.f32 %v64, %v1670
    %v1672 = vpop.f32.mrf.mxu0
    %v1673 = vadd.f32 %v65, %v1672
    %1674 = vmatmul.bf16.gmra.mxu0 %v1634
    %v1675 = vpop.f32.mrf.mxu0
    %v1676 = vadd.f32 %v66, %v1675
    %v1677 = vpop.f32.mrf.mxu0
    %v1678 = vadd.f32 %v67, %v1677
    %1679 = vdwg.mxu0
    %v1680 = vsel %vm678, %v1661, -inf
    %1681 = vmax.xlane.f32.xlu0 %v1680
    %v1682 = vpop.xlane.xlu0 %1681
    %v1683 = vsel %vm678, %v1663, -inf
    %1684 = vmax.xlane.f32.xlu0 %v1683
    %v1685 = vpop.xlane.xlu0 %1684
    %v1686 = vsel %vm678, %v1666, -inf
    %1687 = vmax.xlane.f32.xlu0 %v1686
    %v1688 = vpop.xlane.xlu0 %1687
    %v1689 = vsel %vm678, %v1668, -inf
    %1690 = vmax.xlane.f32.xlu0 %v1689
    %v1691 = vpop.xlane.xlu0 %1690
    %v1692 = vsel %vm678, %v1671, -inf
    %1693 = vmax.xlane.f32.xlu0 %v1692
    %v1694 = vpop.xlane.xlu0 %1693
    %v1695 = vsel %vm678, %v1673, -inf
    %1696 = vmax.xlane.f32.xlu0 %v1695
    %v1697 = vpop.xlane.xlu0 %1696
    %v1698 = vsel %vm678, %v1676, -inf
    %1699 = vmax.xlane.f32.xlu0 %v1698
    %v1700 = vpop.xlane.xlu0 %1699
    %v1701 = vsel %vm678, %v1678, -inf
    %1702 = vmax.xlane.f32.xlu0 %v1701
    %v1703 = vpop.xlane.xlu0 %1702
    %v1704 = vsub.f32 %v1661, %v1682
    %v1705 = vsub.f32 %v1663, %v1685
    %v1706 = vsub.f32 %v1666, %v1688
    %v1707 = vsub.f32 %v1668, %v1691
    %v1708 = vsub.f32 %v1671, %v1694
    %v1709 = vsub.f32 %v1673, %v1697
    %v1710 = vsub.f32 %v1676, %v1700
    %v1711 = vsub.f32 %v1678, %v1703
    %v1712 = vmul.f32 %v1704, 1.442695
    %v1713 = vpow.pop %v1712
    %v1714 = vmul.f32 %v1705, 1.442695
    %v1715 = vpow.pop %v1714
    %v1716 = vmul.f32 %v1706, 1.442695
    %v1717 = vpow.pop %v1716
    %v1718 = vmul.f32 %v1707, 1.442695
    %v1719 = vpow.pop %v1718
    %v1720 = vmul.f32 %v1708, 1.442695
    %v1721 = vpow.pop %v1720
    %v1722 = vmul.f32 %v1709, 1.442695
    %v1723 = vpow.pop %v1722
    %v1724 = vmul.f32 %v1710, 1.442695
    %v1725 = vpow.pop %v1724
    %v1726 = vmul.f32 %v1711, 1.442695
    %v1727 = vpow.pop %v1726
    %v1728 = vsel %vm678, %v1713, 0.0
    %1729 = vadd.xlane.f32.xlu0 %v1728
    %v1730 = vpop.xlane.xlu0 %1729
    %v1731 = vsel %vm678, %v1715, 0.0
    %1732 = vadd.xlane.f32.xlu0 %v1731
    %v1733 = vpop.xlane.xlu0 %1732
    %v1734 = vsel %vm678, %v1717, 0.0
    %1735 = vadd.xlane.f32.xlu0 %v1734
    %v1736 = vpop.xlane.xlu0 %1735
    %v1737 = vsel %vm678, %v1719, 0.0
    %1738 = vadd.xlane.f32.xlu0 %v1737
    %v1739 = vpop.xlane.xlu0 %1738
    %v1740 = vsel %vm678, %v1721, 0.0
    %1741 = vadd.xlane.f32.xlu0 %v1740
    %v1742 = vpop.xlane.xlu0 %1741
    %v1743 = vsel %vm678, %v1723, 0.0
    %1744 = vadd.xlane.f32.xlu0 %v1743
    %v1745 = vpop.xlane.xlu0 %1744
    %v1746 = vsel %vm678, %v1725, 0.0
    %1747 = vadd.xlane.f32.xlu0 %v1746
    %v1748 = vpop.xlane.xlu0 %1747
    %v1749 = vsel %vm678, %v1727, 0.0
    %1750 = vadd.xlane.f32.xlu0 %v1749
    %v1751 = vpop.xlane.xlu0 %1750
    %v1752 = vrcp.pop %v1730
    %v1753 = vrcp.pop %v1733
    %v1754 = vrcp.pop %v1736
    %v1755 = vrcp.pop %v1739
    %v1756 = vrcp.pop %v1742
    %v1757 = vrcp.pop %v1745
    %v1758 = vrcp.pop %v1748
    %v1759 = vrcp.pop %v1751
    %v1760 = vmul.f32 %v1713, %v1752
    %v1761 = vmul.f32 %v1715, %v1753
    %v1762 = vmul.f32 %v1717, %v1754
    %v1763 = vmul.f32 %v1719, %v1755
    %v1764 = vmul.f32 %v1721, %v1756
    %v1765 = vmul.f32 %v1723, %v1757
    %v1766 = vmul.f32 %v1725, %v1758
    %v1767 = vmul.f32 %v1727, %v1759
    %v1768 = vpack.c.bf16 %v1761, %v1760
    %v1769 = vpack.c.bf16 %v1763, %v1762
    %v1770 = vpack.c.bf16 %v1765, %v1764
    %v1771 = vpack.c.bf16 %v1767, %v1766
    %1777 = vrot.lane.b32.xlu0 %v1619, 96
    %v1778 = vpop.permute.xlu0 %1777
    %1779 = vrot.lane.b32.xlu0 %v1620, 96
    %v1780 = vpop.permute.xlu0 %1779
    %1781 = vrot.lane.b32.xlu0 %v1621, 96
    %v1782 = vpop.permute.xlu0 %1781
    %1783 = vrot.lane.b32.xlu0 %v1622, 96
    %v1784 = vpop.permute.xlu0 %1783
    %1785 = vrot.lane.b32.xlu0 %v1623, 96
    %v1786 = vpop.permute.xlu0 %1785
    %v1792 = vsel %vm678, %v1768, 0
    %v1795 = vsel %vm678, %v1769, 0
    %v1798 = vsel %vm678, %v1770, 0
    %v1801 = vsel %vm678, %v1771, 0
    %v1804 = vsel %vm579, %v1786, 0
    %1806 = vmatpush.bf16.msra.mxu0 0
    %1807 = vmatpush.bf16.msra.mxu0 0
    %1808 = vmatpush.bf16.msra.mxu0 0
    %1809 = vmatpush.bf16.msra.mxu0 %v1804
    %1810 = vmatpush.bf16.msra.mxu0 %v1784
    %1811 = vmatpush.bf16.msra.mxu0 %v1782
    %1812 = vmatpush.bf16.msra.mxu0 %v1780
    %1813 = vmatpush.bf16.msra.mxu0 %v1778
    %1814 = vmatmul.bf16.gmra.mxu0 %v1792
    %v1815 = vpop.f32.mrf.mxu0
    %v1816 = vadd.f32 0.0, %v1815
    %v1817 = vpop.f32.mrf.mxu0
    %v1818 = vadd.f32 0.0, %v1817
    %1819 = vmatmul.bf16.gmra.mxu0 %v1795
    %v1820 = vpop.f32.mrf.mxu0
    %v1821 = vadd.f32 0.0, %v1820
    %v1822 = vpop.f32.mrf.mxu0
    %v1823 = vadd.f32 0.0, %v1822
    %1824 = vmatmul.bf16.gmra.mxu0 %v1798
    %v1825 = vpop.f32.mrf.mxu0
    %v1826 = vadd.f32 0.0, %v1825
    %v1827 = vpop.f32.mrf.mxu0
    %v1828 = vadd.f32 0.0, %v1827
    %1829 = vmatmul.bf16.gmra.mxu0 %v1801
    %v1830 = vpop.f32.mrf.mxu0
    %v1831 = vadd.f32 0.0, %v1830
    %v1832 = vpop.f32.mrf.mxu0
    %v1833 = vadd.f32 0.0, %v1832
    %1834 = vdwg.mxu0
    %1837 = vrot.lane.b32.xlu0 %v1821, 8
    %v1838 = vpop.permute.xlu0 %1837
    %1839 = vrot.lane.b32.xlu0 %v1823, 8
    %v1840 = vpop.permute.xlu0 %1839
    %1845 = vrot.lane.b32.xlu0 %v1826, 16
    %v1846 = vpop.permute.xlu0 %1845
    %1847 = vrot.lane.b32.xlu0 %v1828, 16
    %v1848 = vpop.permute.xlu0 %1847
    %1853 = vrot.lane.b32.xlu0 %v1831, 24
    %v1854 = vpop.permute.xlu0 %1853
    %1855 = vrot.lane.b32.xlu0 %v1833, 24
    %v1856 = vpop.permute.xlu0 %1855
    %v1859 = vsel %vm143, %v1816, %v1838
    %v1860 = vsel %vm143, %v1818, %v1840
    %v1861 = vsel %vm369, %v1859, %v1846
    %v1862 = vsel %vm369, %v1860, %v1848
    %v1863 = vsel %vm372, %v1861, %v1854
    %v1864 = vsel %vm372, %v1862, %v1856
    %v1865 = vld [vmem:[#allocation4 + $0xa0] sm:$0xf]
    %v1866 = vld [vmem:[#allocation4 + $0xa4] sm:$0xf]
    %v1867 = vld [vmem:[#allocation4 + $0xa8] sm:$0xf]
    %v1868 = vld [vmem:[#allocation4 + $0xac] sm:$0xf]
    %v1869 = vpack.c.bf16 %v1864, %v1863
    %v1870 = vperm.slane %v1614, 0
    %v1875 = vunpack.c.l.b16 %v1865
    %v1876 = vunpack.c.l.b16 %v1866
    %v1877 = vunpack.c.l.b16 %v1867
    %v1878 = vunpack.c.l.b16 %v1868
    %v1879 = vpack.c.b16 %v1876, %v1875
    %v1880 = vpack.c.b16 %v1878, %v1877
    %v1884 = vsel %vm88, %v1869, 0
    %1886 = vmatpush.bf16.msra.mxu0 0
    %1887 = vmatpush.bf16.msra.mxu0 0
    %1888 = vmatpush.bf16.msra.mxu0 0
    %1889 = vmatpush.bf16.msra.mxu0 0
    %1890 = vmatpush.bf16.msra.mxu0 0
    %1891 = vmatpush.bf16.msra.mxu0 0
    %1892 = vmatpush.bf16.msra.mxu0 %v1880
    %1893 = vmatpush.bf16.msra.mxu0 %v1879
    %1894 = vmatmul.bf16.gmra.mxu0 %v1884
    %v1895 = vpop.f32.mrf.mxu0
    %v1896 = vadd.f32 %v1870, %v1895
    %v1897 = vpop.f32.mrf.mxu0
    %v1898 = vadd.f32 %v1870, %v1897
    %1899 = vdwg.mxu0
    %v1900 = vadd.f32 %v1480, %v1896
    %v1901 = vadd.f32 %v1481, %v1898
    %v1902 = vsel %vm88, %v1900, 0.0
    %1903 = vadd.xlane.f32.xlu0 %v1902
    %v1904 = vpop.xlane.xlu0 %1903
    %v1905 = vsel %vm88, %v1901, 0.0
    %1906 = vadd.xlane.f32.xlu0 %v1905
    %v1907 = vpop.xlane.xlu0 %1906
    %v1908 = vmul.f32 %v1904, %v424
    %v1909 = vmul.f32 %v1907, %v424
    %v1910 = vsub.f32 %v1900, %v1908
    %v1911 = vsub.f32 %v1901, %v1909
    %v1912 = vmul.f32 %v1910, %v1910
    %v1913 = vmul.f32 %v1911, %v1911
    %v1914 = vsel %vm88, %v1912, 0.0
    %1915 = vadd.xlane.f32.xlu0 %v1914
    %v1916 = vpop.xlane.xlu0 %1915
    %v1917 = vsel %vm88, %v1913, 0.0
    %1918 = vadd.xlane.f32.xlu0 %v1917
    %v1919 = vpop.xlane.xlu0 %1918
    %v1920 = vmul.f32 %v1916, %v424
    %v1921 = vmul.f32 %v1919, %v424
    %v1922 = vadd.f32 %v1920, 1e-05
    %v1923 = vadd.f32 %v1921, 1e-05
    %v1924 = vrsqrt.pop %v1922
    %v1925 = vmul.f32 %v1924, %v1922
    %v1926 = vmul.f32 %v1925, %v1924
    %v1927 = vmul.f32 0.5, %v1926
    %v1928 = vsub.f32 1.5, %v1927
    %v1929 = vmul.f32 %v1924, %v1928
    %vm1930 = vweird.f32 %v1922
    %vm1931 = vweird.f32 %v1924
    %vm1932 = vmor %vm1930, %vm1931
    %v1933 = vsel %vm1932, %v1924, %v1929
    %v1934 = vrsqrt.pop %v1923
    %v1935 = vmul.f32 %v1934, %v1923
    %v1936 = vmul.f32 %v1935, %v1934
    %v1937 = vmul.f32 0.5, %v1936
    %v1938 = vsub.f32 1.5, %v1937
    %v1939 = vmul.f32 %v1934, %v1938
    %vm1940 = vweird.f32 %v1923
    %vm1941 = vweird.f32 %v1934
    %vm1942 = vmor %vm1940, %vm1941
    %v1943 = vsel %vm1942, %v1934, %v1939
    %v1944 = vmul.f32 %v1910, %v1933
    %v1945 = vmul.f32 %v1911, %v1943
    %v1946 = vperm.slane %v1093, 2
    %v1947 = vmul.f32 %v1944, %v1946
    %v1948 = vmul.f32 %v1945, %v1946
    %v1949 = vperm.slane %v1093, 3
    %v1950 = vadd.f32 %v1947, %v1949
    %v1951 = vadd.f32 %v1948, %v1949
    %v1952 = vld [vmem:[#allocation4 + $0xb0] sm:$0xf]
    %v1953 = vld [vmem:[#allocation4 + $0xb4] sm:$0xf]
    %v1954 = vld [vmem:[#allocation4 + $0xb8] sm:$0xf]
    %v1955 = vld [vmem:[#allocation4 + $0xbc] sm:$0xf]
    %v1956 = vpack.c.bf16 %v1951, %v1950
    %v1957 = vld [vmem:[#allocation2 + $0x60] sm:$0x1]
    %v1958 = vperm.slane %v1957, 0
    %v1963 = vunpack.c.l.b16 %v1952
    %v1964 = vunpack.c.l.b16 %v1953
    %v1965 = vunpack.c.l.b16 %v1954
    %v1966 = vunpack.c.l.b16 %v1955
    %v1967 = vpack.c.b16 %v1964, %v1963
    %v1968 = vpack.c.b16 %v1966, %v1965
    %v1972 = vsel %vm88, %v1956, 0
    %1974 = vmatpush.bf16.msra.mxu0 0
    %1975 = vmatpush.bf16.msra.mxu0 0
    %1976 = vmatpush.bf16.msra.mxu0 0
    %1977 = vmatpush.bf16.msra.mxu0 0
    %1978 = vmatpush.bf16.msra.mxu0 0
    %1979 = vmatpush.bf16.msra.mxu0 0
    %1980 = vmatpush.bf16.msra.mxu0 %v1968
    %1981 = vmatpush.bf16.msra.mxu0 %v1967
    %1982 = vmatmul.bf16.gmra.mxu0 %v1972
    %v1983 = vpop.f32.mrf.mxu0
    %v1984 = vadd.f32 %v1958, %v1983
    %v1985 = vpop.f32.mrf.mxu0
    %v1986 = vadd.f32 %v1958, %v1985
    %1987 = vdwg.mxu0
    %v1988 = vmax.f32 %v1984, 0.0
    %v1989 = vmax.f32 %v1986, 0.0
    %v1990 = vld [vmem:[#allocation4 + $0xc0] sm:$0xf]
    %v1991 = vld [vmem:[#allocation4 + $0xc4] sm:$0xf]
    %v1992 = vld [vmem:[#allocation4 + $0xc8] sm:$0xf]
    %v1993 = vld [vmem:[#allocation4 + $0xcc] sm:$0xf]
    %v1994 = vld [vmem:[#allocation4 + $0xd0] sm:$0xf]
    %v1995 = vld [vmem:[#allocation4 + $0xd4] sm:$0xf]
    %v1996 = vld [vmem:[#allocation4 + $0xd8] sm:$0xf]
    %v1997 = vld [vmem:[#allocation4 + $0xdc] sm:$0xf]
    %v1998 = vpack.c.bf16 %v1989, %v1988
    %v1999 = vld [vmem:[#allocation2 + $0x68] sm:$0x1]
    %v2000 = vperm.slane %v1999, 0
    %v2009 = vunpack.c.l.b16 %v1990
    %v2010 = vunpack.c.l.b16 %v1991
    %v2011 = vunpack.c.l.b16 %v1992
    %v2012 = vunpack.c.l.b16 %v1993
    %v2013 = vunpack.c.l.b16 %v1994
    %v2014 = vunpack.c.l.b16 %v1995
    %v2015 = vunpack.c.l.b16 %v1996
    %v2016 = vunpack.c.l.b16 %v1997
    %v2017 = vpack.c.b16 %v2010, %v2009
    %v2018 = vpack.c.b16 %v2012, %v2011
    %v2019 = vpack.c.b16 %v2014, %v2013
    %v2020 = vpack.c.b16 %v2016, %v2015
    %v2026 = vsel %vm197, %v1998, 0
    %2028 = vmatpush.bf16.msra.mxu0 0
    %2029 = vmatpush.bf16.msra.mxu0 0
    %2030 = vmatpush.bf16.msra.mxu0 0
    %2031 = vmatpush.bf16.msra.mxu0 0
    %2032 = vmatpush.bf16.msra.mxu0 %v2020
    %2033 = vmatpush.bf16.msra.mxu0 %v2019
    %2034 = vmatpush.bf16.msra.mxu0 %v2018
    %2035 = vmatpush.bf16.msra.mxu0 %v2017
    %2036 = vmatmul.bf16.gmra.mxu0 %v2026
    %v2037 = vpop.f32.mrf.mxu0
    %v2038 = vadd.f32 %v2000, %v2037
    %v2039 = vpop.f32.mrf.mxu0
    %v2040 = vadd.f32 %v2000, %v2039
    %2041 = vdwg.mxu0
    %v2042 = vadd.f32 %v1950, %v2038
    %v2043 = vadd.f32 %v1951, %v2040
    %v2044 = vsel %vm88, %v2042, 0.0
    %2045 = vadd.xlane.f32.xlu0 %v2044
    %v2046 = vpop.xlane.xlu0 %2045
    %v2047 = vsel %vm88, %v2043, 0.0
    %2048 = vadd.xlane.f32.xlu0 %v2047
    %v2049 = vpop.xlane.xlu0 %2048
    %v2050 = vmul.f32 %v2046, %v424
    %v2051 = vmul.f32 %v2049, %v424
    %v2052 = vsub.f32 %v2042, %v2050
    %v2053 = vsub.f32 %v2043, %v2051
    %v2054 = vmul.f32 %v2052, %v2052
    %v2055 = vmul.f32 %v2053, %v2053
    %v2056 = vsel %vm88, %v2054, 0.0
    %2057 = vadd.xlane.f32.xlu0 %v2056
    %v2058 = vpop.xlane.xlu0 %2057
    %v2059 = vsel %vm88, %v2055, 0.0
    %2060 = vadd.xlane.f32.xlu0 %v2059
    %v2061 = vpop.xlane.xlu0 %2060
    %v2062 = vmul.f32 %v2058, %v424
    %v2063 = vmul.f32 %v2061, %v424
    %v2064 = vadd.f32 %v2062, 1e-05
    %v2065 = vadd.f32 %v2063, 1e-05
    %v2066 = vrsqrt.pop %v2064
    %v2067 = vmul.f32 %v2066, %v2064
    %v2068 = vmul.f32 %v2067, %v2066
    %v2069 = vmul.f32 0.5, %v2068
    %v2070 = vsub.f32 1.5, %v2069
    %v2071 = vmul.f32 %v2066, %v2070
    %vm2072 = vweird.f32 %v2064
    %vm2073 = vweird.f32 %v2066
    %vm2074 = vmor %vm2072, %vm2073
    %v2075 = vsel %vm2074, %v2066, %v2071
    %v2076 = vrsqrt.pop %v2065
    %v2077 = vmul.f32 %v2076, %v2065
    %v2078 = vmul.f32 %v2077, %v2076
    %v2079 = vmul.f32 0.5, %v2078
    %v2080 = vsub.f32 1.5, %v2079
    %v2081 = vmul.f32 %v2076, %v2080
    %vm2082 = vweird.f32 %v2065
    %vm2083 = vweird.f32 %v2076
    %vm2084 = vmor %vm2082, %vm2083
    %v2085 = vsel %vm2084, %v2076, %v2081
    %v2086 = vmul.f32 %v2052, %v2075
    %v2087 = vmul.f32 %v2053, %v2085
    %v2088 = vperm.slane %v1093, 4
    %v2089 = vmul.f32 %v2086, %v2088
    %v2090 = vmul.f32 %v2087, %v2088
    %v2091 = vperm.slane %v1093, 5
    %v2092 = vadd.f32 %v2089, %v2091
    %v2093 = vadd.f32 %v2090, %v2091
    %v2094 = vld [vmem:[#allocation2 + $0x70] sm:$0x3]
    %v2095 = vsel %vm88, %v2092, 0.0
    %2096 = vadd.xlane.f32.xlu0 %v2095
    %v2097 = vpop.xlane.xlu0 %2096
    %v2098 = vsel %vm88, %v2093, 0.0
    %2099 = vadd.xlane.f32.xlu0 %v2098
    %v2100 = vpop.xlane.xlu0 %2099
    %v2101 = vmul.f32 %v2097, %v424
    %v2102 = vmul.f32 %v2100, %v424
    %v2103 = vsub.f32 %v2092, %v2101
    %v2104 = vsub.f32 %v2093, %v2102
    %v2105 = vmul.f32 %v2103, %v2103
    %v2106 = vmul.f32 %v2104, %v2104
    %v2107 = vsel %vm88, %v2105, 0.0
    %2108 = vadd.xlane.f32.xlu0 %v2107
    %v2109 = vpop.xlane.xlu0 %2108
    %v2110 = vsel %vm88, %v2106, 0.0
    %2111 = vadd.xlane.f32.xlu0 %v2110
    %v2112 = vpop.xlane.xlu0 %2111
    %v2113 = vmul.f32 %v2109, %v424
    %v2114 = vmul.f32 %v2112, %v424
    %v2115 = vadd.f32 %v2113, 1e-05
    %v2116 = vadd.f32 %v2114, 1e-05
    %v2117 = vrsqrt.pop %v2115
    %v2118 = vmul.f32 %v2117, %v2115
    %v2119 = vmul.f32 %v2118, %v2117
    %v2120 = vmul.f32 0.5, %v2119
    %v2121 = vsub.f32 1.5, %v2120
    %v2122 = vmul.f32 %v2117, %v2121
    %vm2123 = vweird.f32 %v2115
    %vm2124 = vweird.f32 %v2117
    %vm2125 = vmor %vm2123, %vm2124
    %v2126 = vsel %vm2125, %v2117, %v2122
    %v2127 = vrsqrt.pop %v2116
    %v2128 = vmul.f32 %v2127, %v2116
    %v2129 = vmul.f32 %v2128, %v2127
    %v2130 = vmul.f32 0.5, %v2129
    %v2131 = vsub.f32 1.5, %v2130
    %v2132 = vmul.f32 %v2127, %v2131
    %vm2133 = vweird.f32 %v2116
    %vm2134 = vweird.f32 %v2127
    %vm2135 = vmor %vm2133, %vm2134
    %v2136 = vsel %vm2135, %v2127, %v2132
    %v2137 = vmul.f32 %v2103, %v2126
    %v2138 = vmul.f32 %v2104, %v2136
    %v2139 = vperm.slane %v2094, 0
    %v2140 = vmul.f32 %v2137, %v2139
    %v2141 = vmul.f32 %v2138, %v2139
    %v2142 = vperm.slane %v2094, 1
    %v2143 = vadd.f32 %v2140, %v2142
    %v2144 = vadd.f32 %v2141, %v2142
    %v2145 = vld [vmem:[#allocation4 + $0xe0] sm:$0xf]
    %v2146 = vld [vmem:[#allocation4 + $0xe4] sm:$0xf]
    %v2147 = vld [vmem:[#allocation4 + $0xe8] sm:$0xf]
    %v2148 = vld [vmem:[#allocation4 + $0xec] sm:$0xf]
    %v2149 = vpack.c.bf16 %v2144, %v2143
    %v2150 = vld [vmem:[#allocation2 + $0x78] sm:$0x1]
    %v2151 = vperm.slane %v2150, 0
    %v2156 = vunpack.c.l.b16 %v2145
    %v2157 = vunpack.c.l.b16 %v2146
    %v2158 = vunpack.c.l.b16 %v2147
    %v2159 = vunpack.c.l.b16 %v2148
    %v2160 = vpack.c.b16 %v2157, %v2156
    %v2161 = vpack.c.b16 %v2159, %v2158
    %v2165 = vsel %vm88, %v2149, 0
    %2167 = vmatpush.bf16.msra.mxu0 0
    %2168 = vmatpush.bf16.msra.mxu0 0
    %2169 = vmatpush.bf16.msra.mxu0 0
    %2170 = vmatpush.bf16.msra.mxu0 0
    %2171 = vmatpush.bf16.msra.mxu0 0
    %2172 = vmatpush.bf16.msra.mxu0 0
    %2173 = vmatpush.bf16.msra.mxu0 %v2161
    %2174 = vmatpush.bf16.msra.mxu0 %v2160
    %2175 = vmatmul.bf16.gmra.mxu0 %v2165
    %v2176 = vpop.f32.mrf.mxu0
    %v2177 = vadd.f32 %v2151, %v2176
    %v2178 = vpop.f32.mrf.mxu0
    %v2179 = vadd.f32 %v2151, %v2178
    %2180 = vdwg.mxu0
    %v2181 = vxor.u32 %v2177, 2147483648
    %v2182 = vxor.u32 %v2179, 2147483648
    %v2183 = vmul.f32 %v2181, 1.442695
    %v2184 = vpow.pop %v2183
    %v2185 = vmul.f32 %v2182, 1.442695
    %v2186 = vpow.pop %v2185
    %v2187 = vadd.f32 %v2184, 1.0
    %v2188 = vadd.f32 %v2186, 1.0
    %v2189 = vrcp.pop %v2187
    %v2190 = vmul.f32 %v2187, %v2189
    %v2191 = vsub.f32 1.0, %v2190
    %v2192 = vmul.f32 %v2189, %v2191
    %v2193 = vadd.f32 %v2189, %v2192
    %vm2194 = vweird.f32 %v2187
    %vm2195 = vweird.f32 %v2189
    %vm2196 = vmor %vm2194, %vm2195
    %v2197 = vsel %vm2196, %v2189, %v2193
    %v2198 = vand.u32 2147483647, %v2187
    %vm2199 = vcmp.eq.f32.partialorder %v2198, 8.507059e+37
    %v2200 = vand.u32 %v2187, 2147483648
    %v2201 = vor.u32 1.1754944e-38, %v2200
    %v2202 = vsel %vm2199, %v2201, %v2197
    %v2203 = vmul.f32 1.0, %v2202
    %v2204 = vrcp.pop %v2188
    %v2205 = vmul.f32 %v2188, %v2204
    %v2206 = vsub.f32 1.0, %v2205
    %v2207 = vmul.f32 %v2204, %v2206
    %v2208 = vadd.f32 %v2204, %v2207
    %vm2209 = vweird.f32 %v2188
    %vm2210 = vweird.f32 %v2204
    %vm2211 = vmor %vm2209, %vm2210
    %v2212 = vsel %vm2211, %v2204, %v2208
    %v2213 = vand.u32 2147483647, %v2188
    %vm2214 = vcmp.eq.f32.partialorder %v2213, 8.507059e+37
    %v2215 = vand.u32 %v2188, 2147483648
    %v2216 = vor.u32 1.1754944e-38, %v2215
    %v2217 = vsel %vm2214, %v2216, %v2212
    %v2218 = vmul.f32 1.0, %v2217
    %2219 = vst [vmem:[%s3] sm:$0xff] %v2203
    %2220 = vst [vmem:[%s3 + $0x8] sm:$0xff] %v2218
    // Predicated region
    $region22: #{forward.1} parent=1 // pred_check
      _
    $region23: #{forward.1} parent=1 // pred_check_branch
      %2222 = sbr.rel (0) target = $region25
    $region24: #{forward.1} parent=1 // pred_region
      _
    $region25: #{forward.1} parent=1 // pred_fallthru
      _
    // Predicated region
    $region26: #{forward.1} parent=1 // pred_check
      _
    $region27: #{forward.1} parent=1 // pred_check_branch
      %2224 = sbr.rel (0) target = $region29
    $region28: #{forward.1} parent=1 // pred_region
      _
    $region29: #{forward.1} parent=1 // pred_fallthru
      _
    %2225 = vsyncpa [#allocation3], 1
    %2226 = vsyncpa [#allocation5], 1

</llo_original>
